<compile_context>
chip_gen: v5e
topology: v5e:2x2
jax: 0.10.0
libtpu: 0.0.40
codegen_flags: <defaults>
</compile_context>

<pallas_src>
import jax
import jax.numpy as jnp
import numpy as np
from jax.experimental import pallas as pl
from jax.experimental.pallas import tpu as pltpu

# ----------------------------- model config ---------------------------------
T = 8                     # number of (decode) tokens
HIDDEN = 256              # hidden_size
N_HEADS = 2               # num_attention_heads
N_KV_HEADS = 1            # num_key_value_heads
HEAD_DIM = 128            # head_dim (lane-aligned)
INTER = 512               # intermediate_size
NUM_HIDDEN_LAYERS = 4
NUM_KV_LAYERS = 2
NUM_SWIFTKV_LAYERS = NUM_HIDDEN_LAYERS - NUM_KV_LAYERS
GROUP = N_HEADS // N_KV_HEADS
NQ = N_HEADS * HEAD_DIM
NKV = N_KV_HEADS * HEAD_DIM
EPS = 1e-5                # rms_norm_eps
ROPE_THETA = 10000.0
SCALE = HEAD_DIM ** -0.5

# MLP intermediate-dim tile (grid axis 1).
TILE_I = 256
N_TILES = INTER // TILE_I

# layout / slicing preconditions (the review flagged these as silent assumptions)
assert T % 8 == 0, "T must be a multiple of 8 (sublane tiling)"
assert HEAD_DIM % 128 == 0, "HEAD_DIM must be lane-aligned"
assert HIDDEN % 128 == 0, "HIDDEN must be lane-aligned"
assert INTER % TILE_I == 0 and TILE_I % 128 == 0, "bad MLP tile"


# ----------------------------- fused Pallas kernel ---------------------------
def _fused_stack_kernel(hidden_ref, residual_ref, cos_ref, sin_ref, mask_ref,
                        k_ref, v_ref, ln_ref, wq_ref, wo_ref, wgu_ref, wd_ref,
                        out_ref, h_sc, r_sc, x2_sc, attn_sc, mlp_sc):
    layer = pl.program_id(0)
    tile = pl.program_id(1)
    n_layers = pl.num_programs(0)
    n_tiles = pl.num_programs(1)

    # Load hidden/residual into the VMEM carries once, at the start of the grid.
    @pl.when((layer == 0) & (tile == 0))
    def _():
        h_sc[...] = hidden_ref[...]
        r_sc[...] = residual_ref[...]

    # ---- per-layer phase (attention + both RMSNorms), once per layer ----
    @pl.when(tile == 0)
    def _():
        # input_layernorm: fused residual add + RMSNorm (f32)
        res1 = h_sc[...] + r_sc[...]
        x1 = (res1 * jax.lax.rsqrt(jnp.mean(res1 * res1, axis=-1, keepdims=True) + EPS)
              * ln_ref[0:1, :])

        # q projection (bf16 weights, f32 accumulation)
        q = jnp.dot(x1.astype(jnp.bfloat16), wq_ref[...],
                    preferred_element_type=jnp.float32)          # [T, NQ]

        cos = cos_ref[...]          # [T, HEAD_DIM]
        sin = sin_ref[...]          # rotate-half sign already folded in
        mask = mask_ref[...]        # additive causal mask [T, T] (precomputed)

        for h in range(N_HEADS):
            # static 128-aligned lane slices -> no sublane concat / relayouts
            qh = q[:, h * HEAD_DIM:(h + 1) * HEAD_DIM]
            # neox rotate_half via one XLU roll per head
            qh = qh * cos + pltpu.roll(qh, HEAD_DIM // 2, axis=1) * sin
            kv = h // GROUP
            kh = k_ref[:, kv * HEAD_DIM:(kv + 1) * HEAD_DIM]      # bf16
            vh = v_ref[:, kv * HEAD_DIM:(kv + 1) * HEAD_DIM]      # bf16
            s = jax.lax.dot_general(qh.astype(jnp.bfloat16), kh,
                                    (((1,), (1,)), ((), ())),
                                    preferred_element_type=jnp.float32) * SCALE + mask
            m = jnp.max(s, axis=-1, keepdims=True)
            p = jnp.exp(s - m)
            p = p * pl.reciprocal(jnp.sum(p, axis=-1, keepdims=True), approx=True)
            oh = jnp.dot(p.astype(jnp.bfloat16), vh,
                         preferred_element_type=jnp.float32)      # [T, HEAD_DIM]
            # lane-dense bf16 scratch -> o_proj input arrives in MXU dtype
            attn_sc[:, h * HEAD_DIM:(h + 1) * HEAD_DIM] = oh.astype(jnp.bfloat16)

        attn_o = jnp.dot(attn_sc[...], wo_ref[...],
                         preferred_element_type=jnp.float32)      # [T, HIDDEN]

        # post_attention_layernorm: fused add + RMSNorm
        res2 = attn_o + res1
        x2 = (res2 * jax.lax.rsqrt(jnp.mean(res2 * res2, axis=-1, keepdims=True) + EPS)
              * ln_ref[1:2, :])

        r_sc[...] = res2
        x2_sc[...] = x2.astype(jnp.bfloat16)
        mlp_sc[...] = jnp.zeros_like(mlp_sc)

    # ---- per-tile MLP phase: SwiGLU over one INTER tile, accumulate down-proj ----
    x2 = x2_sc[...]                                               # bf16 [T, HIDDEN]
    g = jnp.dot(x2, wgu_ref[0], preferred_element_type=jnp.float32)   # [T, TILE_I]
    u = jnp.dot(x2, wgu_ref[1], preferred_element_type=jnp.float32)
    act = g * pl.reciprocal(1.0 + jnp.exp(-g), approx=True) * u       # silu(g) * u
    mlp_sc[...] += jnp.dot(act.astype(jnp.bfloat16), wd_ref[...],
                           preferred_element_type=jnp.float32)        # [T, HIDDEN]

    # layer epilogue: commit the hidden carry once all INTER tiles are summed
    @pl.when(tile == n_tiles - 1)
    def _():
        h_sc[...] = mlp_sc[...]

    # final RMSNorm fused onto the last layer; out_ref written exactly once
    @pl.when((layer == n_layers - 1) & (tile == n_tiles - 1))
    def _():
        x = mlp_sc[...] + r_sc[...]
        out_ref[...] = (x * jax.lax.rsqrt(jnp.mean(x * x, axis=-1, keepdims=True) + EPS)
                        * ln_ref[2:3, :])


# ----------------------------- pallas_call wrapper ----------------------------
def _rope_tables(positions):
    inv_freq = 1.0 / (ROPE_THETA ** (jnp.arange(0, HEAD_DIM, 2, dtype=jnp.float32) / HEAD_DIM))
    freqs = positions.astype(jnp.float32)[:, None] * inv_freq[None, :]   # [T, HEAD_DIM/2]
    cos = jnp.cos(freqs)
    sin = jnp.sin(freqs)
    cos_full = jnp.concatenate([cos, cos], axis=-1)                      # [T, HEAD_DIM]
    sin_signed = jnp.concatenate([-sin, sin], axis=-1)                   # rotate-half sign folded
    return cos_full, sin_signed


def _stack_params(layer_params, final_norm_w):
    return {
        # ln1 / ln2 / final-norm merged into one per-layer [3, HIDDEN] slab
        "ln": jnp.stack([jnp.concatenate([w["ln1"], w["ln2"], final_norm_w], axis=0)
                         for w in layer_params], axis=0),                 # [L,3,H] f32
        "wq": jnp.stack([w["wq"] for w in layer_params], axis=0),         # [L,H,NQ] bf16
        "wo": jnp.stack([w["wo"] for w in layer_params], axis=0),         # [L,NQ,H] bf16
        "wgu": jnp.stack([jnp.stack([w["wg"], w["wu"]], axis=0)
                          for w in layer_params], axis=0),                # [L,2,H,I] bf16
        "wd": jnp.stack([w["wd"] for w in layer_params], axis=0),         # [L,I,H] bf16
    }


def swiftkv_decode_runner(hidden_states, residual, positions, k_states, v_states,
                          stacked):
    assert v_states.shape[0] == k_states.shape[0]              # torch._check equivalent
    cos, sin_signed = _rope_tables(positions)
    # hoisted loop-invariant additive causal mask (0 on/below diag, -1e30 above)
    mask = jnp.where(jnp.tril(jnp.ones((T, T), dtype=bool)), 0.0, -1e30).astype(jnp.float32)
    # KV states shipped bf16 (halves k/v DMA per layer; attention math bf16/f32-acc)
    k_bf = k_states.astype(jnp.bfloat16)
    v_bf = v_states.astype(jnp.bfloat16)

    # cost estimate so XLA can overlap surrounding HBM work with the weight stream
    per_layer_flops = (2 * T * HIDDEN * NQ + N_HEADS * 4 * T * T * HEAD_DIM
                       + 2 * T * NQ * HIDDEN + 2 * T * HIDDEN * 2 * INTER
                       + 2 * T * INTER * HIDDEN)
    weight_bytes = NUM_SWIFTKV_LAYERS * 2 * (HIDDEN * NQ + NQ * HIDDEN
                                             + 2 * HIDDEN * INTER + INTER * HIDDEN)
    act_bytes = 4 * 3 * T * HIDDEN + 2 * (k_bf.size + v_bf.size)
    ce = pl.CostEstimate(
        flops=int(NUM_SWIFTKV_LAYERS * per_layer_flops),
        transcendentals=int(NUM_SWIFTKV_LAYERS * (N_HEADS * T * T + T * INTER)),
        bytes_accessed=int(weight_bytes + act_bytes))

    in_specs = [
        pl.BlockSpec((T, HIDDEN), lambda l, t: (0, 0)),                      # hidden
        pl.BlockSpec((T, HIDDEN), lambda l, t: (0, 0)),                      # residual
        pl.BlockSpec((T, HEAD_DIM), lambda l, t: (0, 0)),                    # cos
        pl.BlockSpec((T, HEAD_DIM), lambda l, t: (0, 0)),                    # sin (signed)
        pl.BlockSpec((T, T), lambda l, t: (0, 0)),                           # causal mask
        pl.BlockSpec((T, NKV), lambda l, t: (0, l)),                         # k window, layer l
        pl.BlockSpec((T, NKV), lambda l, t: (0, l)),                         # v window, layer l
        pl.BlockSpec((None, 3, HIDDEN), lambda l, t: (l, 0, 0)),             # ln1/ln2/final
        pl.BlockSpec((None, HIDDEN, NQ), lambda l, t: (l, 0, 0)),            # wq
        pl.BlockSpec((None, NQ, HIDDEN), lambda l, t: (l, 0, 0)),            # wo
        pl.BlockSpec((None, 2, HIDDEN, TILE_I), lambda l, t: (l, 0, 0, t)),  # gate/up tile
        pl.BlockSpec((None, TILE_I, HIDDEN), lambda l, t: (l, t, 0)),        # down tile
    ]

    return pl.pallas_call(
        _fused_stack_kernel,
        grid=(NUM_SWIFTKV_LAYERS, N_TILES),
        in_specs=in_specs,
        out_specs=pl.BlockSpec((T, HIDDEN), lambda l, t: (0, 0)),
        out_shape=jax.ShapeDtypeStruct((T, HIDDEN), jnp.float32),
        scratch_shapes=[
            pltpu.VMEM((T, HIDDEN), jnp.float32),      # hidden carry
            pltpu.VMEM((T, HIDDEN), jnp.float32),      # residual carry
            pltpu.VMEM((T, HIDDEN), jnp.bfloat16),     # post-attn-norm act (MLP input)
            pltpu.VMEM((T, NQ), jnp.bfloat16),         # lane-dense attention output
            pltpu.VMEM((T, HIDDEN), jnp.float32),      # down-proj accumulator
        ],
        compiler_params=pltpu.CompilerParams(
            dimension_semantics=("arbitrary", "arbitrary"),
            vmem_limit_bytes=48 * 1024 * 1024),        # explicit; safe on v5e/v6e/v7x
        cost_estimate=ce,
    )(hidden_states, residual, cos, sin_signed, mask, k_bf, v_bf,
      stacked["ln"], stacked["wq"], stacked["wo"], stacked["wgu"], stacked["wd"])


# ----------------------------- pure-JAX reference ----------------------------
def _rms(x, w):
    return x * jax.lax.rsqrt(jnp.mean(x * x, axis=-1, keepdims=True) + EPS) * w


def reference_forward(hidden, residual, positions, k_states, v_states,
                      layer_params, final_norm_w):
    cos_f, sin_signed = _rope_tables(positions)
    cos = cos_f[:, :HEAD_DIM // 2]
    sin = -sin_signed[:, :HEAD_DIM // 2]
    k_split = jnp.split(k_states, NUM_SWIFTKV_LAYERS, axis=-1)
    v_split = jnp.split(v_states, NUM_SWIFTKV_LAYERS, axis=-1)
    mask = jnp.tril(jnp.ones((T, T), bool))
    for w, kl, vl in zip(layer_params, k_split, v_split):
        wq = w["wq"].astype(jnp.float32)
        wo = w["wo"].astype(jnp.float32)
        wg = w["wg"].astype(jnp.float32)
        wu = w["wu"].astype(jnp.float32)
        wd = w["wd"].astype(jnp.float32)
        res1 = hidden + residual
        x1 = _rms(res1, w["ln1"])
        q = x1 @ wq
        attn = jnp.zeros((T, HIDDEN), jnp.float32)
        for h in range(N_HEADS):
            qh = q[:, h * HEAD_DIM:(h + 1) * HEAD_DIM]
            q1, q2 = qh[:, :HEAD_DIM // 2], qh[:, HEAD_DIM // 2:]
            qrot = jnp.concatenate([q1 * cos - q2 * sin, q2 * cos + q1 * sin], axis=-1)
            kv = h // GROUP
            kh = kl[:, kv * HEAD_DIM:(kv + 1) * HEAD_DIM]
            vh = vl[:, kv * HEAD_DIM:(kv + 1) * HEAD_DIM]
            s = (qrot @ kh.T) * SCALE
            s = jnp.where(mask, s, -1e30)
            p = jax.nn.softmax(s, axis=-1)
            attn = attn + (p @ vh) @ wo[h * HEAD_DIM:(h + 1) * HEAD_DIM, :]
        res2 = attn + res1
        x2 = _rms(res2, w["ln2"])
        g = x2 @ wg
        u = x2 @ wu
        hidden = ((g * jax.nn.sigmoid(g)) * u) @ wd
        residual = res2
    return _rms(hidden + residual, final_norm_w)


# ----------------------------- main ------------------------------------------
def _init_params(key):
    layer_params = []
    for _ in range(NUM_SWIFTKV_LAYERS):
        key, *ks = jax.random.split(key, 8)
        layer_params.append({
            "ln1": (1.0 + 0.1 * jax.random.normal(ks[0], (1, HIDDEN))).astype(jnp.float32),
            "wq": (jax.random.normal(ks[1], (HIDDEN, NQ)) / np.sqrt(HIDDEN)).astype(jnp.bfloat16),
            "wo": (jax.random.normal(ks[2], (NQ, HIDDEN)) / np.sqrt(NQ)).astype(jnp.bfloat16),
            "ln2": (1.0 + 0.1 * jax.random.normal(ks[3], (1, HIDDEN))).astype(jnp.float32),
            "wg": (jax.random.normal(ks[4], (HIDDEN, INTER)) / np.sqrt(HIDDEN)).astype(jnp.bfloat16),
            "wu": (jax.random.normal(ks[5], (HIDDEN, INTER)) / np.sqrt(HIDDEN)).astype(jnp.bfloat16),
            "wd": (jax.random.normal(ks[6], (INTER, HIDDEN)) / np.sqrt(INTER)).astype(jnp.bfloat16),
        })
    key, kf = jax.random.split(key)
    final_norm_w = (1.0 + 0.1 * jax.random.normal(kf, (1, HIDDEN))).astype(jnp.float32)
    return layer_params, final_norm_w, key


if __name__ == "__main__":
    key = jax.random.PRNGKey(0)
    layer_params, final_norm_w, key = _init_params(key)
    stacked = _stack_params(layer_params, final_norm_w)

    key, k1, k2, k3, k4 = jax.random.split(key, 5)
    hidden_states = jax.random.normal(k1, (T, HIDDEN), jnp.float32)
    residual = jax.random.normal(k2, (T, HIDDEN), jnp.float32)
    positions = jnp.arange(T, dtype=jnp.int32) * 3 + 1
    kv_width = NUM_SWIFTKV_LAYERS * NKV
    k_states = jax.random.normal(k3, (T, kv_width), jnp.float32)
    v_states = jax.random.normal(k4, (T, kv_width), jnp.float32)

    out = swiftkv_decode_runner(hidden_states, residual, positions,
                                k_states, v_states, stacked)
    out = jax.block_until_ready(out)

    ref = reference_forward(hidden_states, residual, positions,
                            k_states, v_states, layer_params, final_norm_w)
    # NOTE: pl.reciprocal(approx=True) (softmax/SiLU) and bf16 weights/KV/attention
    # deviate from the f32 reference at roughly EUP-approx / bf16 precision.
    np.testing.assert_allclose(np.asarray(out), np.asarray(ref), rtol=5e-2, atol=5e-2)

    print("KERNEL_OK")
</pallas_src>

<mosaic_0001>
module attributes {stable_mosaic.version = 11 : i64} {
  func.func @_fused_stack_kernel(%arg0: i32, %arg1: i32, %arg2: memref<8x256xf32, #tpu.memory_space<vmem>>, %arg3: memref<8x256xf32, #tpu.memory_space<vmem>>, %arg4: memref<8x128xf32, #tpu.memory_space<vmem>>, %arg5: memref<8x128xf32, #tpu.memory_space<vmem>>, %arg6: memref<8x8xf32, #tpu.memory_space<vmem>>, %arg7: memref<8x128xbf16, #tpu.memory_space<vmem>>, %arg8: memref<8x128xbf16, #tpu.memory_space<vmem>>, %arg9: memref<1x3x256xf32, #tpu.memory_space<vmem>>, %arg10: memref<1x256x256xbf16, #tpu.memory_space<vmem>>, %arg11: memref<1x256x256xbf16, #tpu.memory_space<vmem>>, %arg12: memref<1x2x256x256xbf16, #tpu.memory_space<vmem>>, %arg13: memref<1x256x256xbf16, #tpu.memory_space<vmem>>, %arg14: memref<8x256xf32, #tpu.memory_space<vmem>>, %arg15: memref<8x256xf32, #tpu.memory_space<vmem>>, %arg16: memref<8x256xf32, #tpu.memory_space<vmem>>, %arg17: memref<8x256xbf16, #tpu.memory_space<vmem>>, %arg18: memref<8x256xbf16, #tpu.memory_space<vmem>>, %arg19: memref<8x256xf32, #tpu.memory_space<vmem>>) attributes {dimension_semantics = [#tpu.dimension_semantics<arbitrary>, #tpu.dimension_semantics<arbitrary>], iteration_bounds = array<i64: 2, 2>, scalar_prefetch = 0 : i64, scratch_operands = 5 : i64, tpu.core_type = #tpu.core_type<tc>, window_params = [{pipeline_mode = #tpu.pipeline_mode<synchronous>, transform_indices = @transform_0, window_bounds = array<i64: 8, 256>}, {pipeline_mode = #tpu.pipeline_mode<synchronous>, transform_indices = @transform_1, window_bounds = array<i64: 8, 256>}, {pipeline_mode = #tpu.pipeline_mode<synchronous>, transform_indices = @transform_2, window_bounds = array<i64: 8, 128>}, {pipeline_mode = #tpu.pipeline_mode<synchronous>, transform_indices = @transform_3, window_bounds = array<i64: 8, 128>}, {pipeline_mode = #tpu.pipeline_mode<synchronous>, transform_indices = @transform_4, window_bounds = array<i64: 8, 8>}, {transform_indices = @transform_5, window_bounds = array<i64: 8, 128>}, {transform_indices = @transform_6, window_bounds = array<i64: 8, 128>}, {transform_indices = @transform_7, window_bounds = array<i64: 1, 3, 256>}, {transform_indices = @transform_8, window_bounds = array<i64: 1, 256, 256>}, {transform_indices = @transform_9, window_bounds = array<i64: 1, 256, 256>}, {transform_indices = @transform_10, window_bounds = array<i64: 1, 2, 256, 256>}, {transform_indices = @transform_11, window_bounds = array<i64: 1, 256, 256>}, {pipeline_mode = #tpu.pipeline_mode<synchronous>, transform_indices = @transform_12, window_bounds = array<i64: 8, 256>}]} {
    %c0_i32 = arith.constant 0 : i32
    %0 = arith.cmpi eq, %arg0, %c0_i32 : i32
    %c0_i32_0 = arith.constant 0 : i32
    %1 = arith.cmpi eq, %arg1, %c0_i32_0 : i32
    %2 = arith.andi %0, %1 : i1
    %3 = arith.extui %2 : i1 to i32
    %c0_i32_1 = arith.constant 0 : i32
    %4 = arith.cmpi ne, %3, %c0_i32_1 : i32
    scf.if %4 {
      %c0_27 = arith.constant 0 : index
      %c0_28 = arith.constant 0 : index
      %38 = vector.load %arg2[%c0_27, %c0_28] : memref<8x256xf32, #tpu.memory_space<vmem>>, vector<8x256xf32>
      %c0_29 = arith.constant 0 : index
      %c0_30 = arith.constant 0 : index
      %39 = vector.load %arg15[%c0_29, %c0_30] : memref<8x256xf32, #tpu.memory_space<vmem>>, vector<8x256xf32>
      tpu.vector_store %arg15[%c0_29, %c0_30], %38 {strides = array<i32>} : memref<8x256xf32, #tpu.memory_space<vmem>>, vector<8x256xf32>,
      %c0_31 = arith.constant 0 : index
      %c0_32 = arith.constant 0 : index
      %40 = vector.load %arg3[%c0_31, %c0_32] : memref<8x256xf32, #tpu.memory_space<vmem>>, vector<8x256xf32>
      %c0_33 = arith.constant 0 : index
      %c0_34 = arith.constant 0 : index
      %41 = vector.load %arg16[%c0_33, %c0_34] : memref<8x256xf32, #tpu.memory_space<vmem>>, vector<8x256xf32>
      tpu.vector_store %arg16[%c0_33, %c0_34], %40 {strides = array<i32>} : memref<8x256xf32, #tpu.memory_space<vmem>>, vector<8x256xf32>,
    } else {
    }
    %c0_i32_2 = arith.constant 0 : i32
    %5 = arith.cmpi eq, %arg1, %c0_i32_2 : i32
    %6 = arith.extui %5 : i1 to i32
    %c0_i32_3 = arith.constant 0 : i32
    %7 = arith.cmpi ne, %6, %c0_i32_3 : i32
    scf.if %7 {
      %c0_27 = arith.constant 0 : index
      %c0_28 = arith.constant 0 : index
      %38 = vector.load %arg15[%c0_27, %c0_28] : memref<8x256xf32, #tpu.memory_space<vmem>>, vector<8x256xf32>
      %c0_29 = arith.constant 0 : index
      %c0_30 = arith.constant 0 : index
      %39 = vector.load %arg16[%c0_29, %c0_30] : memref<8x256xf32, #tpu.memory_space<vmem>>, vector<8x256xf32>
      %40 = arith.addf %38, %39 : vector<8x256xf32>
      %41 = arith.mulf %40, %40 : vector<8x256xf32>
      %cst_31 = arith.constant dense<0.000000e+00> : vector<8xf32>
      %42 = vector.multi_reduction <add>, %41, %cst_31 [1] : vector<8x256xf32> to vector<8xf32>
      %43 = vector.shape_cast %42 : vector<8xf32> to vector<8x1xf32>
      %cst_32 = arith.constant 2.560000e+02 : f32
      %44 = vector.broadcast %cst_32 : f32 to vector<8x1xf32>
      %45 = arith.divf %43, %44 : vector<8x1xf32>
      %cst_33 = arith.constant 9.99999974E-6 : f32
      %46 = vector.broadcast %cst_33 : f32 to vector<8x1xf32>
      %47 = arith.addf %45, %46 : vector<8x1xf32>
      %48 = math.rsqrt %47 : vector<8x1xf32>
      %49 = vector.broadcast %48 : vector<8x1xf32> to vector<8x256xf32>
      %50 = arith.mulf %40, %49 : vector<8x256xf32>
      %c0_34 = arith.constant 0 : index
      %c0_35 = arith.constant 0 : index
      %c0_36 = arith.constant 0 : index
      %51 = vector.load %arg9[%c0_34, %c0_35, %c0_36] : memref<1x3x256xf32, #tpu.memory_space<vmem>>, vector<1x1x256xf32>
      %52 = vector.shape_cast %51 : vector<1x1x256xf32> to vector<1x256xf32>
      %53 = vector.broadcast %52 : vector<1x256xf32> to vector<8x256xf32>
      %54 = arith.mulf %50, %53 : vector<8x256xf32>
      %55 = arith.truncf %54 : vector<8x256xf32> to vector<8x256xbf16>
      %c0_37 = arith.constant 0 : index
      %c0_38 = arith.constant 0 : index
      %c0_39 = arith.constant 0 : index
      %56 = vector.load %arg10[%c0_37, %c0_38, %c0_39] : memref<1x256x256xbf16, #tpu.memory_space<vmem>>, vector<1x256x256xbf16>
      %57 = vector.shape_cast %56 : vector<1x256x256xbf16> to vector<256x256xbf16>
      %cst_40 = arith.constant dense<0.000000e+00> : vector<8x256xf32>
      %58 = tpu.matmul %55, %57, %cst_40 {dimension_numbers = #tpu.dot_dimension_numbers<[1], [0], [0], [1], [0, 0, 1, 1], [], []>} : vector<8x256xbf16>, vector<256x256xbf16>, vector<8x256xf32> -> vector<8x256xf32>
      %c0_41 = arith.constant 0 : index
      %c0_42 = arith.constant 0 : index
      %59 = vector.load %arg4[%c0_41, %c0_42] : memref<8x128xf32, #tpu.memory_space<vmem>>, vector<8x128xf32>
      %c0_43 = arith.constant 0 : index
      %c0_44 = arith.constant 0 : index
      %60 = vector.load %arg5[%c0_43, %c0_44] : memref<8x128xf32, #tpu.memory_space<vmem>>, vector<8x128xf32>
      %c0_45 = arith.constant 0 : index
      %c0_46 = arith.constant 0 : index
      %61 = vector.load %arg6[%c0_45, %c0_46] : memref<8x8xf32, #tpu.memory_space<vmem>>, vector<8x8xf32>
      %62 = vector.extract_strided_slice %58 {offsets = [0, 0], sizes = [8, 128], strides = [1, 1]} : vector<8x256xf32> to vector<8x128xf32>
      %63 = arith.mulf %62, %59 : vector<8x128xf32>
      %c64_i32 = arith.constant 64 : i32
      %64 = tpu.dynamic_rotate %62 by %c64_i32 dim 1 : vector<8x128xf32>, i32 -> vector<8x128xf32>
      %65 = arith.mulf %64, %60 : vector<8x128xf32>
      %66 = arith.addf %63, %65 : vector<8x128xf32>
      %c0_47 = arith.constant 0 : index
      %c0_48 = arith.constant 0 : index
      %67 = vector.load %arg7[%c0_47, %c0_48] : memref<8x128xbf16, #tpu.memory_space<vmem>>, vector<8x128xbf16>
      %c0_49 = arith.constant 0 : index
      %c0_50 = arith.constant 0 : index
      %68 = vector.load %arg8[%c0_49, %c0_50] : memref<8x128xbf16, #tpu.memory_space<vmem>>, vector<8x128xbf16>
      %69 = arith.truncf %66 : vector<8x128xf32> to vector<8x128xbf16>
      %cst_51 = arith.constant dense<0.000000e+00> : vector<8x8xf32>
      %70 = tpu.matmul %69, %67, %cst_51 {dimension_numbers = #tpu.dot_dimension_numbers<[1], [1], [0], [0], [0, 0, 1, 0], [], []>} : vector<8x128xbf16>, vector<8x128xbf16>, vector<8x8xf32> -> vector<8x8xf32>
      %cst_52 = arith.constant 0.0883883461 : f32
      %71 = vector.broadcast %cst_52 : f32 to vector<8x8xf32>
      %72 = arith.mulf %70, %71 : vector<8x8xf32>
      %73 = arith.addf %72, %61 : vector<8x8xf32>
      %cst_53 = arith.constant dense<0xFF800000> : vector<8xf32>
      %74 = vector.multi_reduction <maximumf>, %73, %cst_53 [1] : vector<8x8xf32> to vector<8xf32>
      %75 = vector.shape_cast %74 : vector<8xf32> to vector<8x1xf32>
      %76 = vector.broadcast %75 : vector<8x1xf32> to vector<8x8xf32>
      %77 = arith.subf %73, %76 : vector<8x8xf32>
      %78 = math.exp %77 : vector<8x8xf32>
      %cst_54 = arith.constant dense<0.000000e+00> : vector<8xf32>
      %79 = vector.multi_reduction <add>, %78, %cst_54 [1] : vector<8x8xf32> to vector<8xf32>
      %80 = vector.shape_cast %79 : vector<8xf32> to vector<8x1xf32>
      %81 = tpu.reciprocal %80 {approx = true} : vector<8x1xf32> -> vector<8x1xf32>
      %82 = vector.broadcast %81 : vector<8x1xf32> to vector<8x8xf32>
      %83 = arith.mulf %78, %82 : vector<8x8xf32>
      %84 = arith.truncf %83 : vector<8x8xf32> to vector<8x8xbf16>
      %cst_55 = arith.constant dense<0.000000e+00> : vector<8x128xf32>
      %85 = tpu.matmul %84, %68, %cst_55 {dimension_numbers = #tpu.dot_dimension_numbers<[1], [0], [0], [1], [0, 0, 1, 1], [], []>} : vector<8x8xbf16>, vector<8x128xbf16>, vector<8x128xf32> -> vector<8x128xf32>
      %86 = arith.truncf %85 : vector<8x128xf32> to vector<8x128xbf16>
      %c0_56 = arith.constant 0 : index
      %c0_57 = arith.constant 0 : index
      %87 = vector.load %arg18[%c0_56, %c0_57] : memref<8x256xbf16, #tpu.memory_space<vmem>>, vector<8x128xbf16>
      tpu.vector_store %arg18[%c0_56, %c0_57], %86 {strides = array<i32>} : memref<8x256xbf16, #tpu.memory_space<vmem>>, vector<8x128xbf16>,
      %88 = vector.extract_strided_slice %58 {offsets = [0, 128], sizes = [8, 128], strides = [1, 1]} : vector<8x256xf32> to vector<8x128xf32>
      %89 = arith.mulf %88, %59 : vector<8x128xf32>
      %c64_i32_58 = arith.constant 64 : i32
      %90 = tpu.dynamic_rotate %88 by %c64_i32_58 dim 1 : vector<8x128xf32>, i32 -> vector<8x128xf32>
      %91 = arith.mulf %90, %60 : vector<8x128xf32>
      %92 = arith.addf %89, %91 : vector<8x128xf32>
      %c0_59 = arith.constant 0 : index
      %c0_60 = arith.constant 0 : index
      %93 = vector.load %arg7[%c0_59, %c0_60] : memref<8x128xbf16, #tpu.memory_space<vmem>>, vector<8x128xbf16>
      %c0_61 = arith.constant 0 : index
      %c0_62 = arith.constant 0 : index
      %94 = vector.load %arg8[%c0_61, %c0_62] : memref<8x128xbf16, #tpu.memory_space<vmem>>, vector<8x128xbf16>
      %95 = arith.truncf %92 : vector<8x128xf32> to vector<8x128xbf16>
      %cst_63 = arith.constant dense<0.000000e+00> : vector<8x8xf32>
      %96 = tpu.matmul %95, %93, %cst_63 {dimension_numbers = #tpu.dot_dimension_numbers<[1], [1], [0], [0], [0, 0, 1, 0], [], []>} : vector<8x128xbf16>, vector<8x128xbf16>, vector<8x8xf32> -> vector<8x8xf32>
      %cst_64 = arith.constant 0.0883883461 : f32
      %97 = vector.broadcast %cst_64 : f32 to vector<8x8xf32>
      %98 = arith.mulf %96, %97 : vector<8x8xf32>
      %99 = arith.addf %98, %61 : vector<8x8xf32>
      %cst_65 = arith.constant dense<0xFF800000> : vector<8xf32>
      %100 = vector.multi_reduction <maximumf>, %99, %cst_65 [1] : vector<8x8xf32> to vector<8xf32>
      %101 = vector.shape_cast %100 : vector<8xf32> to vector<8x1xf32>
      %102 = vector.broadcast %101 : vector<8x1xf32> to vector<8x8xf32>
      %103 = arith.subf %99, %102 : vector<8x8xf32>
      %104 = math.exp %103 : vector<8x8xf32>
      %cst_66 = arith.constant dense<0.000000e+00> : vector<8xf32>
      %105 = vector.multi_reduction <add>, %104, %cst_66 [1] : vector<8x8xf32> to vector<8xf32>
      %106 = vector.shape_cast %105 : vector<8xf32> to vector<8x1xf32>
      %107 = tpu.reciprocal %106 {approx = true} : vector<8x1xf32> -> vector<8x1xf32>
      %108 = vector.broadcast %107 : vector<8x1xf32> to vector<8x8xf32>
      %109 = arith.mulf %104, %108 : vector<8x8xf32>
      %110 = arith.truncf %109 : vector<8x8xf32> to vector<8x8xbf16>
      %cst_67 = arith.constant dense<0.000000e+00> : vector<8x128xf32>
      %111 = tpu.matmul %110, %94, %cst_67 {dimension_numbers = #tpu.dot_dimension_numbers<[1], [0], [0], [1], [0, 0, 1, 1], [], []>} : vector<8x8xbf16>, vector<8x128xbf16>, vector<8x128xf32> -> vector<8x128xf32>
      %112 = arith.truncf %111 : vector<8x128xf32> to vector<8x128xbf16>
      %c0_68 = arith.constant 0 : index
      %c128 = arith.constant 128 : index
      %113 = vector.load %arg18[%c0_68, %c128] : memref<8x256xbf16, #tpu.memory_space<vmem>>, vector<8x128xbf16>
      tpu.vector_store %arg18[%c0_68, %c128], %112 {strides = array<i32>} : memref<8x256xbf16, #tpu.memory_space<vmem>>, vector<8x128xbf16>,
      %c0_69 = arith.constant 0 : index
      %c0_70 = arith.constant 0 : index
      %114 = vector.load %arg18[%c0_69, %c0_70] : memref<8x256xbf16, #tpu.memory_space<vmem>>, vector<8x256xbf16>
      %c0_71 = arith.constant 0 : index
      %c0_72 = arith.constant 0 : index
      %c0_73 = arith.constant 0 : index
      %115 = vector.load %arg11[%c0_71, %c0_72, %c0_73] : memref<1x256x256xbf16, #tpu.memory_space<vmem>>, vector<1x256x256xbf16>
      %116 = vector.shape_cast %115 : vector<1x256x256xbf16> to vector<256x256xbf16>
      %cst_74 = arith.constant dense<0.000000e+00> : vector<8x256xf32>
      %117 = tpu.matmul %114, %116, %cst_74 {dimension_numbers = #tpu.dot_dimension_numbers<[1], [0], [0], [1], [0, 0, 1, 1], [], []>} : vector<8x256xbf16>, vector<256x256xbf16>, vector<8x256xf32> -> vector<8x256xf32>
      %118 = arith.addf %117, %40 : vector<8x256xf32>
      %119 = arith.mulf %118, %118 : vector<8x256xf32>
      %cst_75 = arith.constant dense<0.000000e+00> : vector<8xf32>
      %120 = vector.multi_reduction <add>, %119, %cst_75 [1] : vector<8x256xf32> to vector<8xf32>
      %121 = vector.shape_cast %120 : vector<8xf32> to vector<8x1xf32>
      %cst_76 = arith.constant 2.560000e+02 : f32
      %122 = vector.broadcast %cst_76 : f32 to vector<8x1xf32>
      %123 = arith.divf %121, %122 : vector<8x1xf32>
      %cst_77 = arith.constant 9.99999974E-6 : f32
      %124 = vector.broadcast %cst_77 : f32 to vector<8x1xf32>
      %125 = arith.addf %123, %124 : vector<8x1xf32>
      %126 = math.rsqrt %125 : vector<8x1xf32>
      %127 = vector.broadcast %126 : vector<8x1xf32> to vector<8x256xf32>
      %128 = arith.mulf %118, %127 : vector<8x256xf32>
      %c0_78 = arith.constant 0 : index
      %c1_79 = arith.constant 1 : index
      %c0_80 = arith.constant 0 : index
      %129 = vector.load %arg9[%c0_78, %c1_79, %c0_80] : memref<1x3x256xf32, #tpu.memory_space<vmem>>, vector<1x1x256xf32>
      %130 = vector.shape_cast %129 : vector<1x1x256xf32> to vector<1x256xf32>
      %131 = vector.broadcast %130 : vector<1x256xf32> to vector<8x256xf32>
      %132 = arith.mulf %128, %131 : vector<8x256xf32>
      %c0_81 = arith.constant 0 : index
      %c0_82 = arith.constant 0 : index
      %133 = vector.load %arg16[%c0_81, %c0_82] : memref<8x256xf32, #tpu.memory_space<vmem>>, vector<8x256xf32>
      tpu.vector_store %arg16[%c0_81, %c0_82], %118 {strides = array<i32>} : memref<8x256xf32, #tpu.memory_space<vmem>>, vector<8x256xf32>,
      %134 = arith.truncf %132 : vector<8x256xf32> to vector<8x256xbf16>
      %c0_83 = arith.constant 0 : index
      %c0_84 = arith.constant 0 : index
      %135 = vector.load %arg17[%c0_83, %c0_84] : memref<8x256xbf16, #tpu.memory_space<vmem>>, vector<8x256xbf16>
      tpu.vector_store %arg17[%c0_83, %c0_84], %134 {strides = array<i32>} : memref<8x256xbf16, #tpu.memory_space<vmem>>, vector<8x256xbf16>,
      %cst_85 = arith.constant 0.000000e+00 : f32
      %136 = vector.broadcast %cst_85 : f32 to vector<8x256xf32>
      %c0_86 = arith.constant 0 : index
      %c0_87 = arith.constant 0 : index
      %137 = vector.load %arg19[%c0_86, %c0_87] : memref<8x256xf32, #tpu.memory_space<vmem>>, vector<8x256xf32>
      tpu.vector_store %arg19[%c0_86, %c0_87], %136 {strides = array<i32>} : memref<8x256xf32, #tpu.memory_space<vmem>>, vector<8x256xf32>,
    } else {
    }
    %c0 = arith.constant 0 : index
    %c0_4 = arith.constant 0 : index
    %8 = vector.load %arg17[%c0, %c0_4] : memref<8x256xbf16, #tpu.memory_space<vmem>>, vector<8x256xbf16>
    %c0_5 = arith.constant 0 : index
    %c0_6 = arith.constant 0 : index
    %c0_7 = arith.constant 0 : index
    %c0_8 = arith.constant 0 : index
    %9 = vector.load %arg12[%c0_5, %c0_6, %c0_7, %c0_8] : memref<1x2x256x256xbf16, #tpu.memory_space<vmem>>, vector<1x1x256x256xbf16>
    %10 = vector.shape_cast %9 : vector<1x1x256x256xbf16> to vector<256x256xbf16>
    %cst = arith.constant dense<0.000000e+00> : vector<8x256xf32>
    %11 = tpu.matmul %8, %10, %cst {dimension_numbers = #tpu.dot_dimension_numbers<[1], [0], [0], [1], [0, 0, 1, 1], [], []>} : vector<8x256xbf16>, vector<256x256xbf16>, vector<8x256xf32> -> vector<8x256xf32>
    %c0_9 = arith.constant 0 : index
    %c1 = arith.constant 1 : index
    %c0_10 = arith.constant 0 : index
    %c0_11 = arith.constant 0 : index
    %12 = vector.load %arg12[%c0_9, %c1, %c0_10, %c0_11] : memref<1x2x256x256xbf16, #tpu.memory_space<vmem>>, vector<1x1x256x256xbf16>
    %13 = vector.shape_cast %12 : vector<1x1x256x256xbf16> to vector<256x256xbf16>
    %cst_12 = arith.constant dense<0.000000e+00> : vector<8x256xf32>
    %14 = tpu.matmul %8, %13, %cst_12 {dimension_numbers = #tpu.dot_dimension_numbers<[1], [0], [0], [1], [0, 0, 1, 1], [], []>} : vector<8x256xbf16>, vector<256x256xbf16>, vector<8x256xf32> -> vector<8x256xf32>
    %cst_13 = arith.constant 0.000000e+00 : f32
    %15 = vector.broadcast %cst_13 : f32 to vector<8x256xf32>
    %16 = arith.subf %15, %11 : vector<8x256xf32>
    %17 = math.exp %16 : vector<8x256xf32>
    %cst_14 = arith.constant 1.000000e+00 : f32
    %18 = vector.broadcast %cst_14 : f32 to vector<8x256xf32>
    %19 = arith.addf %18, %17 : vector<8x256xf32>
    %20 = tpu.reciprocal %19 {approx = true} : vector<8x256xf32> -> vector<8x256xf32>
    %21 = arith.mulf %11, %20 : vector<8x256xf32>
    %22 = arith.mulf %21, %14 : vector<8x256xf32>
    %c0_15 = arith.constant 0 : index
    %c0_16 = arith.constant 0 : index
    %23 = vector.load %arg19[%c0_15, %c0_16] : memref<8x256xf32, #tpu.memory_space<vmem>>, vector<8x256xf32>
    %24 = arith.truncf %22 : vector<8x256xf32> to vector<8x256xbf16>
    %c0_17 = arith.constant 0 : index
    %c0_18 = arith.constant 0 : index
    %c0_19 = arith.constant 0 : index
    %25 = vector.load %arg13[%c0_17, %c0_18, %c0_19] : memref<1x256x256xbf16, #tpu.memory_space<vmem>>, vector<1x256x256xbf16>
    %26 = vector.shape_cast %25 : vector<1x256x256xbf16> to vector<256x256xbf16>
    %cst_20 = arith.constant dense<0.000000e+00> : vector<8x256xf32>
    %27 = tpu.matmul %24, %26, %cst_20 {dimension_numbers = #tpu.dot_dimension_numbers<[1], [0], [0], [1], [0, 0, 1, 1], [], []>} : vector<8x256xbf16>, vector<256x256xbf16>, vector<8x256xf32> -> vector<8x256xf32>
    %28 = arith.addf %23, %27 : vector<8x256xf32>
    %c0_21 = arith.constant 0 : index
    %c0_22 = arith.constant 0 : index
    %29 = vector.load %arg19[%c0_21, %c0_22] : memref<8x256xf32, #tpu.memory_space<vmem>>, vector<8x256xf32>
    tpu.vector_store %arg19[%c0_21, %c0_22], %28 {strides = array<i32>} : memref<8x256xf32, #tpu.memory_space<vmem>>, vector<8x256xf32>,
    %c1_i32 = arith.constant 1 : i32
    %30 = arith.cmpi eq, %arg1, %c1_i32 : i32
    %31 = arith.extui %30 : i1 to i32
    %c0_i32_23 = arith.constant 0 : i32
    %32 = arith.cmpi ne, %31, %c0_i32_23 : i32
    scf.if %32 {
      %c0_27 = arith.constant 0 : index
      %c0_28 = arith.constant 0 : index
      %38 = vector.load %arg19[%c0_27, %c0_28] : memref<8x256xf32, #tpu.memory_space<vmem>>, vector<8x256xf32>
      %c0_29 = arith.constant 0 : index
      %c0_30 = arith.constant 0 : index
      %39 = vector.load %arg15[%c0_29, %c0_30] : memref<8x256xf32, #tpu.memory_space<vmem>>, vector<8x256xf32>
      tpu.vector_store %arg15[%c0_29, %c0_30], %38 {strides = array<i32>} : memref<8x256xf32, #tpu.memory_space<vmem>>, vector<8x256xf32>,
    } else {
    }
    %c1_i32_24 = arith.constant 1 : i32
    %33 = arith.cmpi eq, %arg0, %c1_i32_24 : i32
    %c1_i32_25 = arith.constant 1 : i32
    %34 = arith.cmpi eq, %arg1, %c1_i32_25 : i32
    %35 = arith.andi %33, %34 : i1
    %36 = arith.extui %35 : i1 to i32
    %c0_i32_26 = arith.constant 0 : i32
    %37 = arith.cmpi ne, %36, %c0_i32_26 : i32
    scf.if %37 {
      %c0_27 = arith.constant 0 : index
      %c0_28 = arith.constant 0 : index
      %38 = vector.load %arg19[%c0_27, %c0_28] : memref<8x256xf32, #tpu.memory_space<vmem>>, vector<8x256xf32>
      %c0_29 = arith.constant 0 : index
      %c0_30 = arith.constant 0 : index
      %39 = vector.load %arg16[%c0_29, %c0_30] : memref<8x256xf32, #tpu.memory_space<vmem>>, vector<8x256xf32>
      %40 = arith.addf %38, %39 : vector<8x256xf32>
      %41 = arith.mulf %40, %40 : vector<8x256xf32>
      %cst_31 = arith.constant dense<0.000000e+00> : vector<8xf32>
      %42 = vector.multi_reduction <add>, %41, %cst_31 [1] : vector<8x256xf32> to vector<8xf32>
      %43 = vector.shape_cast %42 : vector<8xf32> to vector<8x1xf32>
      %cst_32 = arith.constant 2.560000e+02 : f32
      %44 = vector.broadcast %cst_32 : f32 to vector<8x1xf32>
      %45 = arith.divf %43, %44 : vector<8x1xf32>
      %cst_33 = arith.constant 9.99999974E-6 : f32
      %46 = vector.broadcast %cst_33 : f32 to vector<8x1xf32>
      %47 = arith.addf %45, %46 : vector<8x1xf32>
      %48 = math.rsqrt %47 : vector<8x1xf32>
      %49 = vector.broadcast %48 : vector<8x1xf32> to vector<8x256xf32>
      %50 = arith.mulf %40, %49 : vector<8x256xf32>
      %c0_34 = arith.constant 0 : index
      %c2 = arith.constant 2 : index
      %c0_35 = arith.constant 0 : index
      %51 = vector.load %arg9[%c0_34, %c2, %c0_35] : memref<1x3x256xf32, #tpu.memory_space<vmem>>, vector<1x1x256xf32>
      %52 = vector.shape_cast %51 : vector<1x1x256xf32> to vector<1x256xf32>
      %53 = vector.broadcast %52 : vector<1x256xf32> to vector<8x256xf32>
      %54 = arith.mulf %50, %53 : vector<8x256xf32>
      %c0_36 = arith.constant 0 : index
      %c0_37 = arith.constant 0 : index
      %55 = vector.load %arg14[%c0_36, %c0_37] : memref<8x256xf32, #tpu.memory_space<vmem>>, vector<8x256xf32>
      tpu.vector_store %arg14[%c0_36, %c0_37], %54 {strides = array<i32>} : memref<8x256xf32, #tpu.memory_space<vmem>>, vector<8x256xf32>,
    } else {
    }
    return
  }
  func.func @transform_0(%arg0: i32, %arg1: i32) -> (i32, i32) {
    %c0_i32 = arith.constant 0 : i32
    %c0_i32_0 = arith.constant 0 : i32
    %c0_i32_1 = arith.constant 0 : i32
    return %c0_i32, %c0_i32_0 : i32, i32
  }
  func.func @transform_1(%arg0: i32, %arg1: i32) -> (i32, i32) {
    %c0_i32 = arith.constant 0 : i32
    %c0_i32_0 = arith.constant 0 : i32
    %c0_i32_1 = arith.constant 0 : i32
    return %c0_i32, %c0_i32_0 : i32, i32
  }
  func.func @transform_2(%arg0: i32, %arg1: i32) -> (i32, i32) {
    %c0_i32 = arith.constant 0 : i32
    %c0_i32_0 = arith.constant 0 : i32
    %c0_i32_1 = arith.constant 0 : i32
    return %c0_i32, %c0_i32_0 : i32, i32
  }
  func.func @transform_3(%arg0: i32, %arg1: i32) -> (i32, i32) {
    %c0_i32 = arith.constant 0 : i32
    %c0_i32_0 = arith.constant 0 : i32
    %c0_i32_1 = arith.constant 0 : i32
    return %c0_i32, %c0_i32_0 : i32, i32
  }
  func.func @transform_4(%arg0: i32, %arg1: i32) -> (i32, i32) {
    %c0_i32 = arith.constant 0 : i32
    %c0_i32_0 = arith.constant 0 : i32
    %c0_i32_1 = arith.constant 0 : i32
    return %c0_i32, %c0_i32_0 : i32, i32
  }
  func.func @transform_5(%arg0: i32, %arg1: i32) -> (i32, i32) {
    %c0_i32 = arith.constant 0 : i32
    %c0_i32_0 = arith.constant 0 : i32
    return %c0_i32, %arg0 : i32, i32
  }
  func.func @transform_6(%arg0: i32, %arg1: i32) -> (i32, i32) {
    %c0_i32 = arith.constant 0 : i32
    %c0_i32_0 = arith.constant 0 : i32
    return %c0_i32, %arg0 : i32, i32
  }
  func.func @transform_7(%arg0: i32, %arg1: i32) -> (i32, i32, i32) {
    %c0_i32 = arith.constant 0 : i32
    %c0_i32_0 = arith.constant 0 : i32
    %c0_i32_1 = arith.constant 0 : i32
    return %arg0, %c0_i32, %c0_i32_0 : i32, i32, i32
  }
  func.func @transform_8(%arg0: i32, %arg1: i32) -> (i32, i32, i32) {
    %c0_i32 = arith.constant 0 : i32
    %c0_i32_0 = arith.constant 0 : i32
    %c0_i32_1 = arith.constant 0 : i32
    return %arg0, %c0_i32, %c0_i32_0 : i32, i32, i32
  }
  func.func @transform_9(%arg0: i32, %arg1: i32) -> (i32, i32, i32) {
    %c0_i32 = arith.constant 0 : i32
    %c0_i32_0 = arith.constant 0 : i32
    %c0_i32_1 = arith.constant 0 : i32
    return %arg0, %c0_i32, %c0_i32_0 : i32, i32, i32
  }
  func.func @transform_10(%arg0: i32, %arg1: i32) -> (i32, i32, i32, i32) {
    %c0_i32 = arith.constant 0 : i32
    %c0_i32_0 = arith.constant 0 : i32
    %c0_i32_1 = arith.constant 0 : i32
    return %arg0, %c0_i32, %c0_i32_0, %arg1 : i32, i32, i32, i32
  }
  func.func @transform_11(%arg0: i32, %arg1: i32) -> (i32, i32, i32) {
    %c0_i32 = arith.constant 0 : i32
    %c0_i32_0 = arith.constant 0 : i32
    return %arg0, %arg1, %c0_i32 : i32, i32, i32
  }
  func.func @transform_12(%arg0: i32, %arg1: i32) -> (i32, i32) {
    %c0_i32 = arith.constant 0 : i32
    %c0_i32_0 = arith.constant 0 : i32
    %c0_i32_1 = arith.constant 0 : i32
    return %c0_i32, %c0_i32_0 : i32, i32
  }
}

</mosaic_0001>

<llo_original>
// kernel: tpu_custom_call.1
$region0: #{tpu_custom_call.1}
  #allocation0 [shape = 'u32[]', space=smem, size = 0x4, offset = 0x4, fixed_abs, tag = 'smem constant byte address 0x4 - core index']
  #allocation1 [shape = 'u32[72,128]{1,0:T(1,128)}', space=vmem, size = 0x9000, scoped, tag = 'internal scratch']
  #allocation2 [shape = 'f32[8,256]{1,0:T(8,128)}', space=vmem, size = 0x2000, scoped, tag = 'scratch operand']
  #allocation3 [shape = 'f32[8,256]{1,0:T(8,128)}', space=vmem, size = 0x2000, scoped, tag = 'scratch operand']
  #allocation4 [shape = 'bf16[8,256]{1,0:T(8,128)(2,1)}', space=vmem, size = 0x1000, scoped, tag = 'scratch operand']
  #allocation5 [shape = 'bf16[8,256]{1,0:T(8,128)(2,1)}', space=vmem, size = 0x1000, scoped, tag = 'scratch operand']
  #allocation6 [shape = 'f32[8,256]{1,0:T(8,128)}', space=vmem, size = 0x2000, scoped, tag = 'scratch operand']
  %s0 = inlined_call_operand.vmem [shape: f32[8,256], index: 0, kind: input, shape index: {}]
  %s1 = inlined_call_operand.hbm [shape: f32[8,256], index: 1, kind: input, shape index: {}]
  %s2 = inlined_call_operand.vmem [shape: f32[8,128], index: 2, kind: input, shape index: {}]
  %s3 = inlined_call_operand.hbm [shape: f32[8,128], index: 3, kind: input, shape index: {}]
  %s4 = inlined_call_operand.hbm [shape: f32[8,8], index: 4, kind: input, shape index: {}]
  %s5 = inlined_call_operand.vmem [shape: bf16[8,256], index: 5, kind: input, shape index: {}]
  %s6 = inlined_call_operand.hbm [shape: bf16[8,256], index: 6, kind: input, shape index: {}]
  %s7 = inlined_call_operand.vmem [shape: f32[2,3,256], index: 7, kind: input, shape index: {}]
  %s8 = inlined_call_operand.hbm [shape: bf16[2,256,256], index: 8, kind: input, shape index: {}]
  %s9 = inlined_call_operand.hbm [shape: bf16[2,256,256], index: 9, kind: input, shape index: {}]
  %s10 = inlined_call_operand.hbm [shape: bf16[2,2,256,512], index: 10, kind: input, shape index: {}]
  %s11 = inlined_call_operand.hbm [shape: bf16[2,512,256], index: 11, kind: input, shape index: {}]
  %s12 = inlined_call_operand.hbm [shape: f32[8,256], index: 12, kind: output, shape index: {}]
  %s13 = sld [smem:[#allocation0]]
  $region129: #{tpu_custom_call.1} parent=0
    _
  %s15 = ssub.s32 1, %s13
  %s16 = scalar_select 0, %s15, %s13
  $region1: #{tpu_custom_call.1} parent=0
    #allocation7 [shape = 'u8[8192]{0}', space=vmem, size = 0x2000, scoped, tag = 'input window, operand 1, single buffered']
    #allocation8 [shape = 's32[2]{0}', space=sflag, size = 0x8, scoped, tag = 'scoped memory for tpu_custom_call.1']
    #allocation9 [shape = 's32[2]{0}', space=sflag, size = 0x8, scoped, tag = 'scoped memory for tpu_custom_call.1']
    #allocation10 [shape = 'u8[4096]{0}', space=vmem, size = 0x1000, scoped, tag = 'input window, operand 3, single buffered']
    #allocation11 [shape = 's32[1]{0}', space=sflag, size = 0x4, scoped, tag = 'scoped memory for tpu_custom_call.1']
    #allocation12 [shape = 'u8[4096]{0}', space=vmem, size = 0x1000, scoped, tag = 'input window, operand 4, single buffered']
    #allocation13 [shape = 'u8[4096]{0}', space=vmem, size = 0x1000, scoped, tag = 'input window, operand 6']
    #allocation14 [shape = 's32[2]{0}', space=sflag, size = 0x8, scoped, tag = 'scoped memory for tpu_custom_call.1']
    #allocation15 [shape = 'u8[262144]{0}', space=vmem, size = 0x40000, scoped, tag = 'input window, operand 8']
    #allocation16 [shape = 'u8[262144]{0}', space=vmem, size = 0x40000, scoped, tag = 'input window, operand 9']
    #allocation17 [shape = 's32[2]{0}', space=sflag, size = 0x8, scoped, tag = 'scoped memory for tpu_custom_call.1']
    #allocation18 [shape = 'u8[524288]{0}', space=vmem, size = 0x80000, scoped, tag = 'input window, operand 10']
    #allocation19 [shape = 'u8[262144]{0}', space=vmem, size = 0x40000, scoped, tag = 'input window, operand 11']
    #allocation20 [shape = 's32[2]{0}', space=sflag, size = 0x8, scoped, tag = 'scoped memory for tpu_custom_call.1']
    #allocation21 [shape = 'u8[8192]{0}', space=vmem, size = 0x2000, scoped, tag = 'output window, operand 0, single buffered']
    %17 = vsyncpa [#allocation8], 0
    %18 = vsyncpa [#allocation11], 0
    %19 = vsyncpa [#allocation14], 0
    %s20 = scalar_lea.sflag [#allocation14], 1
    %21 = vsyncpa %s20, 0
    %22 = vsyncpa [#allocation17], 0
    %s23 = scalar_lea.sflag [#allocation17], 1
    %24 = vsyncpa %s23, 0
    %25 = vsyncpa [#allocation20], 0
    %s26 = scalar_lea.sflag [#allocation20], 1
    %27 = vsyncpa %s26, 0
    %28 = vsyncpa [#allocation9], 0
    loop: start=0, step=1, limit=6
    $region2: #{tpu_custom_call.1} parent=1 // loop_pre_header
      _
    $region3: #{tpu_custom_call.1} parent=1 // loop_header
      %s30 = sphi 0, %s34
      %p31 = scmp.ge.s32.totalorder %s30, 6
      %s37 = sphi 0, %s49
      %s38 = sphi 0, %s45
      %s39 = sphi 0, %s37
      %s40 = sphi 0, %s38
      %s41 = sphi 0, %s39
      %s42 = sphi 0, %s40
      %s50 = sphi 0, %s50
      %s52 = sphi 0, %s50
      %s53 = sphi 0, %s52
      %s67 = sphi 0, %s53
      %s71 = sphi 0, %s71
      %s73 = sphi 0, %s71
      %s74 = sphi 0, %s73
      %s88 = sphi 0, %s74
      %s92 = sphi 0, %s92
      %s94 = sphi 0, %s92
      %s95 = sphi 0, %s94
      %s109 = sphi 0, %s95
      %s113 = sphi 0, %s113
      %s115 = sphi 0, %s113
      %s116 = sphi 0, %s115
      %s130 = sphi 0, %s116
      %s134 = sphi 0, %s134
      %s136 = sphi 0, %s134
      %s137 = sphi 0, %s136
      %s151 = sphi 0, %s137
      %s157 = sphi 0, %s159
      %s160 = sphi 0, %s157
      %s161 = sphi 0, %s160
      %s177 = sphi 0, %s161
      %s183 = sphi 0, %s185
      %s186 = sphi 0, %s183
      %s187 = sphi 0, %s186
      %s203 = sphi 0, %s187
      %s209 = sphi 0, %s211
      %s212 = sphi 0, %s209
      %s213 = sphi 0, %s212
      %s229 = sphi 0, %s213
      %s235 = sphi 0, %s237
      %s238 = sphi 0, %s235
      %s239 = sphi 0, %s238
      %s255 = sphi 0, %s239
      %s261 = sphi 0, %s263
      %s264 = sphi 0, %s261
      %s265 = sphi 0, %s264
      %s281 = sphi 0, %s265
      %s289 = sphi 0, %s291
      %s292 = sphi 0, %s289
      %s293 = sphi 0, %s292
      %s309 = sphi 0, %s293
      %s317 = sphi 0, %s319
      %s320 = sphi 0, %s317
      %s321 = sphi 0, %s320
      %s337 = sphi 0, %s321
      %s341 = sphi 0, %s341
      %s343 = sphi 0, %s341
      %s344 = sphi 0, %s343
      %s358 = sphi 0, %s344
    $region4: #{tpu_custom_call.1} parent=1 // loop_header_branch
      %33 = sbr.rel (%p31) target = $region8
    $region5: #{tpu_custom_call.1} parent=1 // loop_body
      %s35 = ssub.s32 %s30, 1
      %s36 = ssub.s32 %s30, 2
      %s43 = sadd.s32 1, %s38
      %p44 = scmp.ge.s32.totalorder %s43, 2
      %s45 = scalar_select %p44, 0, %s43
      %s46 = sadd.s32 1, %s37
      %s47 = scalar_select %p44, %s46, %s37
      %p48 = scmp.ge.s32.totalorder %s47, 2
      %s49 = scalar_select %p48, 0, %s47
      %s51 = sadd.s32 %s50, 1
      %p54 = scmp.eq.s32.totalorder %s30, 3
      %p55 = scmp.ne.s32.totalorder %s50, %s52
      %p56 = scmp.eq.s32.totalorder %s30, 0
      %p57 = por %p55, %p56
      %p58 = scmp.ne.s32.totalorder %s50, %s52
      %p59 = scmp.eq.s32.totalorder %s35, 3
      %p60 = por %p58, %p59
      %p61 = scmp.ne.s32.totalorder %s52, %s53
      %p62 = scmp.eq.s32.totalorder %s35, 0
      %p63 = por %p61, %p62
      %p64 = scmp.ne.s32.totalorder %s52, %s53
      %p65 = scmp.eq.s32.totalorder %s36, 3
      %p66 = por %p64, %p65
      %p68 = scmp.ne.s32.totalorder %s53, %s67
      %p69 = scmp.eq.s32.totalorder %s36, 0
      %p70 = por %p68, %p69
      %s72 = sadd.s32 %s71, 1
      %p75 = scmp.eq.s32.totalorder %s30, 3
      %p76 = scmp.ne.s32.totalorder %s71, %s73
      %p77 = scmp.eq.s32.totalorder %s30, 0
      %p78 = por %p76, %p77
      %p79 = scmp.ne.s32.totalorder %s71, %s73
      %p80 = scmp.eq.s32.totalorder %s35, 3
      %p81 = por %p79, %p80
      %p82 = scmp.ne.s32.totalorder %s73, %s74
      %p83 = scmp.eq.s32.totalorder %s35, 0
      %p84 = por %p82, %p83
      %p85 = scmp.ne.s32.totalorder %s73, %s74
      %p86 = scmp.eq.s32.totalorder %s36, 3
      %p87 = por %p85, %p86
      %p89 = scmp.ne.s32.totalorder %s74, %s88
      %p90 = scmp.eq.s32.totalorder %s36, 0
      %p91 = por %p89, %p90
      %s93 = sadd.s32 %s92, 1
      %p96 = scmp.eq.s32.totalorder %s30, 3
      %p97 = scmp.ne.s32.totalorder %s92, %s94
      %p98 = scmp.eq.s32.totalorder %s30, 0
      %p99 = por %p97, %p98
      %p100 = scmp.ne.s32.totalorder %s92, %s94
      %p101 = scmp.eq.s32.totalorder %s35, 3
      %p102 = por %p100, %p101
      %p103 = scmp.ne.s32.totalorder %s94, %s95
      %p104 = scmp.eq.s32.totalorder %s35, 0
      %p105 = por %p103, %p104
      %p106 = scmp.ne.s32.totalorder %s94, %s95
      %p107 = scmp.eq.s32.totalorder %s36, 3
      %p108 = por %p106, %p107
      %p110 = scmp.ne.s32.totalorder %s95, %s109
      %p111 = scmp.eq.s32.totalorder %s36, 0
      %p112 = por %p110, %p111
      %s114 = sadd.s32 %s113, 1
      %p117 = scmp.eq.s32.totalorder %s30, 3
      %p118 = scmp.ne.s32.totalorder %s113, %s115
      %p119 = scmp.eq.s32.totalorder %s30, 0
      %p120 = por %p118, %p119
      %p121 = scmp.ne.s32.totalorder %s113, %s115
      %p122 = scmp.eq.s32.totalorder %s35, 3
      %p123 = por %p121, %p122
      %p124 = scmp.ne.s32.totalorder %s115, %s116
      %p125 = scmp.eq.s32.totalorder %s35, 0
      %p126 = por %p124, %p125
      %p127 = scmp.ne.s32.totalorder %s115, %s116
      %p128 = scmp.eq.s32.totalorder %s36, 3
      %p129 = por %p127, %p128
      %p131 = scmp.ne.s32.totalorder %s116, %s130
      %p132 = scmp.eq.s32.totalorder %s36, 0
      %p133 = por %p131, %p132
      %s135 = sadd.s32 %s134, 1
      %p138 = scmp.eq.s32.totalorder %s30, 3
      %p139 = scmp.ne.s32.totalorder %s134, %s136
      %p140 = scmp.eq.s32.totalorder %s30, 0
      %p141 = por %p139, %p140
      %p142 = scmp.ne.s32.totalorder %s134, %s136
      %p143 = scmp.eq.s32.totalorder %s35, 3
      %p144 = por %p142, %p143
      %p145 = scmp.ne.s32.totalorder %s136, %s137
      %p146 = scmp.eq.s32.totalorder %s35, 0
      %p147 = por %p145, %p146
      %p148 = scmp.ne.s32.totalorder %s136, %s137
      %p149 = scmp.eq.s32.totalorder %s36, 3
      %p150 = por %p148, %p149
      %p152 = scmp.ne.s32.totalorder %s137, %s151
      %p153 = scmp.eq.s32.totalorder %s36, 0
      %p154 = por %p152, %p153
      %s155 = ssub.s32 %s37, %s49
      %p156 = scmp.eq.s32.totalorder %s155, 0
      %s158 = sadd.s32 %s157, 1
      %s159 = scalar_select %p156, %s157, %s158
      %p162 = pneg %p156
      %p163 = scmp.eq.s32.totalorder %s30, 3
      %p164 = por %p162, %p163
      %p165 = scmp.ne.s32.totalorder %s157, %s160
      %p166 = scmp.eq.s32.totalorder %s30, 0
      %p167 = por %p165, %p166
      %p168 = scmp.ne.s32.totalorder %s157, %s160
      %p169 = scmp.eq.s32.totalorder %s35, 3
      %p170 = por %p168, %p169
      %p171 = scmp.ne.s32.totalorder %s160, %s161
      %p172 = scmp.eq.s32.totalorder %s35, 0
      %p173 = por %p171, %p172
      %p174 = scmp.ne.s32.totalorder %s160, %s161
      %p175 = scmp.eq.s32.totalorder %s36, 3
      %p176 = por %p174, %p175
      %p178 = scmp.ne.s32.totalorder %s161, %s177
      %p179 = scmp.eq.s32.totalorder %s36, 0
      %p180 = por %p178, %p179
      %s181 = ssub.s32 %s37, %s49
      %p182 = scmp.eq.s32.totalorder %s181, 0
      %s184 = sadd.s32 %s183, 1
      %s185 = scalar_select %p182, %s183, %s184
      %p188 = pneg %p182
      %p189 = scmp.eq.s32.totalorder %s30, 3
      %p190 = por %p188, %p189
      %p191 = scmp.ne.s32.totalorder %s183, %s186
      %p192 = scmp.eq.s32.totalorder %s30, 0
      %p193 = por %p191, %p192
      %p194 = scmp.ne.s32.totalorder %s183, %s186
      %p195 = scmp.eq.s32.totalorder %s35, 3
      %p196 = por %p194, %p195
      %p197 = scmp.ne.s32.totalorder %s186, %s187
      %p198 = scmp.eq.s32.totalorder %s35, 0
      %p199 = por %p197, %p198
      %p200 = scmp.ne.s32.totalorder %s186, %s187
      %p201 = scmp.eq.s32.totalorder %s36, 3
      %p202 = por %p200, %p201
      %p204 = scmp.ne.s32.totalorder %s187, %s203
      %p205 = scmp.eq.s32.totalorder %s36, 0
      %p206 = por %p204, %p205
      %s207 = ssub.s32 %s37, %s49
      %p208 = scmp.eq.s32.totalorder %s207, 0
      %s210 = sadd.s32 %s209, 1
      %s211 = scalar_select %p208, %s209, %s210
      %p214 = pneg %p208
      %p215 = scmp.eq.s32.totalorder %s30, 3
      %p216 = por %p214, %p215
      %p217 = scmp.ne.s32.totalorder %s209, %s212
      %p218 = scmp.eq.s32.totalorder %s30, 0
      %p219 = por %p217, %p218
      %p220 = scmp.ne.s32.totalorder %s209, %s212
      %p221 = scmp.eq.s32.totalorder %s35, 3
      %p222 = por %p220, %p221
      %p223 = scmp.ne.s32.totalorder %s212, %s213
      %p224 = scmp.eq.s32.totalorder %s35, 0
      %p225 = por %p223, %p224
      %p226 = scmp.ne.s32.totalorder %s212, %s213
      %p227 = scmp.eq.s32.totalorder %s36, 3
      %p228 = por %p226, %p227
      %p230 = scmp.ne.s32.totalorder %s213, %s229
      %p231 = scmp.eq.s32.totalorder %s36, 0
      %p232 = por %p230, %p231
      %s233 = ssub.s32 %s37, %s49
      %p234 = scmp.eq.s32.totalorder %s233, 0
      %s236 = sadd.s32 %s235, 1
      %s237 = scalar_select %p234, %s235, %s236
      %p240 = pneg %p234
      %p241 = scmp.eq.s32.totalorder %s30, 3
      %p242 = por %p240, %p241
      %p243 = scmp.ne.s32.totalorder %s235, %s238
      %p244 = scmp.eq.s32.totalorder %s30, 0
      %p245 = por %p243, %p244
      %p246 = scmp.ne.s32.totalorder %s235, %s238
      %p247 = scmp.eq.s32.totalorder %s35, 3
      %p248 = por %p246, %p247
      %p249 = scmp.ne.s32.totalorder %s238, %s239
      %p250 = scmp.eq.s32.totalorder %s35, 0
      %p251 = por %p249, %p250
      %p252 = scmp.ne.s32.totalorder %s238, %s239
      %p253 = scmp.eq.s32.totalorder %s36, 3
      %p254 = por %p252, %p253
      %p256 = scmp.ne.s32.totalorder %s239, %s255
      %p257 = scmp.eq.s32.totalorder %s36, 0
      %p258 = por %p256, %p257
      %s259 = ssub.s32 %s37, %s49
      %p260 = scmp.eq.s32.totalorder %s259, 0
      %s262 = sadd.s32 %s261, 1
      %s263 = scalar_select %p260, %s261, %s262
      %p266 = pneg %p260
      %p267 = scmp.eq.s32.totalorder %s30, 3
      %p268 = por %p266, %p267
      %p269 = scmp.ne.s32.totalorder %s261, %s264
      %p270 = scmp.eq.s32.totalorder %s30, 0
      %p271 = por %p269, %p270
      %p272 = scmp.ne.s32.totalorder %s261, %s264
      %p273 = scmp.eq.s32.totalorder %s35, 3
      %p274 = por %p272, %p273
      %p275 = scmp.ne.s32.totalorder %s264, %s265
      %p276 = scmp.eq.s32.totalorder %s35, 0
      %p277 = por %p275, %p276
      %p278 = scmp.ne.s32.totalorder %s264, %s265
      %p279 = scmp.eq.s32.totalorder %s36, 3
      %p280 = por %p278, %p279
      %p282 = scmp.ne.s32.totalorder %s265, %s281
      %p283 = scmp.eq.s32.totalorder %s36, 0
      %p284 = por %p282, %p283
      %s285 = ssub.s32 %s37, %s49
      %s286 = ssub.s32 %s38, %s45
      %s287 = sor.u32 %s285, %s286
      %p288 = scmp.eq.s32.totalorder %s287, 0
      %s290 = sadd.s32 %s289, 1
      %s291 = scalar_select %p288, %s289, %s290
      %p294 = pneg %p288
      %p295 = scmp.eq.s32.totalorder %s30, 3
      %p296 = por %p294, %p295
      %p297 = scmp.ne.s32.totalorder %s289, %s292
      %p298 = scmp.eq.s32.totalorder %s30, 0
      %p299 = por %p297, %p298
      %p300 = scmp.ne.s32.totalorder %s289, %s292
      %p301 = scmp.eq.s32.totalorder %s35, 3
      %p302 = por %p300, %p301
      %p303 = scmp.ne.s32.totalorder %s292, %s293
      %p304 = scmp.eq.s32.totalorder %s35, 0
      %p305 = por %p303, %p304
      %p306 = scmp.ne.s32.totalorder %s292, %s293
      %p307 = scmp.eq.s32.totalorder %s36, 3
      %p308 = por %p306, %p307
      %p310 = scmp.ne.s32.totalorder %s293, %s309
      %p311 = scmp.eq.s32.totalorder %s36, 0
      %p312 = por %p310, %p311
      %s313 = ssub.s32 %s37, %s49
      %s314 = ssub.s32 %s38, %s45
      %s315 = sor.u32 %s313, %s314
      %p316 = scmp.eq.s32.totalorder %s315, 0
      %s318 = sadd.s32 %s317, 1
      %s319 = scalar_select %p316, %s317, %s318
      %p322 = pneg %p316
      %p323 = scmp.eq.s32.totalorder %s30, 3
      %p324 = por %p322, %p323
      %p325 = scmp.ne.s32.totalorder %s317, %s320
      %p326 = scmp.eq.s32.totalorder %s30, 0
      %p327 = por %p325, %p326
      %p328 = scmp.ne.s32.totalorder %s317, %s320
      %p329 = scmp.eq.s32.totalorder %s35, 3
      %p330 = por %p328, %p329
      %p331 = scmp.ne.s32.totalorder %s320, %s321
      %p332 = scmp.eq.s32.totalorder %s35, 0
      %p333 = por %p331, %p332
      %p334 = scmp.ne.s32.totalorder %s320, %s321
      %p335 = scmp.eq.s32.totalorder %s36, 3
      %p336 = por %p334, %p335
      %p338 = scmp.ne.s32.totalorder %s321, %s337
      %p339 = scmp.eq.s32.totalorder %s36, 0
      %p340 = por %p338, %p339
      %s342 = sadd.s32 %s341, 1
      %p345 = scmp.eq.s32.totalorder %s30, 3
      %p346 = scmp.ne.s32.totalorder %s341, %s343
      %p347 = scmp.eq.s32.totalorder %s30, 0
      %p348 = por %p346, %p347
      %p349 = scmp.ne.s32.totalorder %s341, %s343
      %p350 = scmp.eq.s32.totalorder %s35, 3
      %p351 = por %p349, %p350
      %p352 = scmp.ne.s32.totalorder %s343, %s344
      %p353 = scmp.eq.s32.totalorder %s35, 0
      %p354 = por %p352, %p353
      %p355 = scmp.ne.s32.totalorder %s343, %s344
      %p356 = scmp.eq.s32.totalorder %s36, 3
      %p357 = por %p355, %p356
      %p359 = scmp.ne.s32.totalorder %s344, %s358
      %p360 = scmp.eq.s32.totalorder %s36, 0
      %p361 = por %p359, %p360
      %p362 = scmp.le.s32.totalorder 1, %s30
      %p363 = scmp.lt.s32.totalorder %s30, 5
      %p364 = pnand %p362, %p363
      %p365 = pneg %p364
      // Predicated region
      $region9: #{tpu_custom_call.1} parent=5 // pred_check
        _
      $region10: #{tpu_custom_call.1} parent=5 // pred_check_branch
        %367 = sbr.rel (%p364) target = $region12
      $region11: #{tpu_custom_call.1} parent=5 // pred_region
        %s368 = ssub.s32 %s30, 1
        // Predicated region
        $region13: #{tpu_custom_call.1} parent=11 // pred_check
          %p369 = pneg %p63
        $region14: #{tpu_custom_call.1} parent=11 // pred_check_branch
          %371 = sbr.rel (%p369) target = $region16
        $region15: #{tpu_custom_call.1} parent=11 // pred_region
          _
        $region16: #{tpu_custom_call.1} parent=11 // pred_fallthru
          _
        // Predicated region
        $region17: #{tpu_custom_call.1} parent=11 // pred_check
          %p372 = pneg %p84
        $region18: #{tpu_custom_call.1} parent=11 // pred_check_branch
          %374 = sbr.rel (%p372) target = $region20
        $region19: #{tpu_custom_call.1} parent=11 // pred_region
          %376 = vsyncadd [#allocation8], 0
          %s378 = sshll.u32 %s1, 4
          %s379 = int_to_ptr.hbm [resolvable:$true] %s378
          %s380 = sshll.u32 [#allocation7], 4
          %s381 = int_to_ptr.vmem [resolvable:$true] %s380
          %383 = dma.hbm_to_vmem [thread:$0]  %s379, 256, %s381, [#allocation8]
        $region20: #{tpu_custom_call.1} parent=11 // pred_fallthru
          _
        // Predicated region
        $region21: #{tpu_custom_call.1} parent=11 // pred_check
          %p384 = pneg %p105
        $region22: #{tpu_custom_call.1} parent=11 // pred_check_branch
          %386 = sbr.rel (%p384) target = $region24
        $region23: #{tpu_custom_call.1} parent=11 // pred_region
          _
        $region24: #{tpu_custom_call.1} parent=11 // pred_fallthru
          _
        // Predicated region
        $region25: #{tpu_custom_call.1} parent=11 // pred_check
          %p387 = pneg %p126
        $region26: #{tpu_custom_call.1} parent=11 // pred_check_branch
          %389 = sbr.rel (%p387) target = $region28
        $region27: #{tpu_custom_call.1} parent=11 // pred_region
          %391 = vsyncadd [#allocation11], 0
          %s393 = sshll.u32 %s3, 4
          %s394 = int_to_ptr.hbm [resolvable:$true] %s393
          %s395 = sshll.u32 [#allocation10], 4
          %s396 = int_to_ptr.vmem [resolvable:$true] %s395
          %398 = dma.hbm_to_vmem [thread:$0]  %s394, 128, %s396, [#allocation11]
        $region28: #{tpu_custom_call.1} parent=11 // pred_fallthru
          _
        // Predicated region
        $region29: #{tpu_custom_call.1} parent=11 // pred_check
          %p399 = pneg %p147
        $region30: #{tpu_custom_call.1} parent=11 // pred_check_branch
          %401 = sbr.rel (%p399) target = $region32
        $region31: #{tpu_custom_call.1} parent=11 // pred_region
          %403 = vsyncadd [#allocation11], 0
          %s405 = sshll.u32 %s4, 4
          %s406 = int_to_ptr.hbm [resolvable:$true] %s405
          %s407 = sshll.u32 [#allocation12], 4
          %s408 = int_to_ptr.vmem [resolvable:$true] %s407
          %410 = dma.hbm_to_vmem [thread:$0]  %s406, 128, %s408, [#allocation11]
        $region32: #{tpu_custom_call.1} parent=11 // pred_fallthru
          _
      $region12: #{tpu_custom_call.1} parent=5 // pred_fallthru
        _
      %p411 = scmp.lt.s32.totalorder %s30, 4
      // Predicated region
      $region33: #{tpu_custom_call.1} parent=5 // pred_check
        %p412 = pneg %p411
      $region34: #{tpu_custom_call.1} parent=5 // pred_check_branch
        %414 = sbr.rel (%p412) target = $region36
      $region35: #{tpu_custom_call.1} parent=5 // pred_region
        // Predicated region
        $region37: #{tpu_custom_call.1} parent=35 // pred_check
          %p415 = pneg %p167
        $region38: #{tpu_custom_call.1} parent=35 // pred_check_branch
          %417 = sbr.rel (%p415) target = $region40
        $region39: #{tpu_custom_call.1} parent=35 // pred_region
          %p418 = scmp.lt.s32.totalorder %s37, 1
          %s419 = scalar_select %p418, %s37, 1
          %s420 = smul.addr %s419, 4
          %s421 = scalar_lea.vmem %s5, %s420
        $region40: #{tpu_custom_call.1} parent=35 // pred_fallthru
          _
        // Predicated region
        $region41: #{tpu_custom_call.1} parent=35 // pred_check
          %p422 = pneg %p193
        $region42: #{tpu_custom_call.1} parent=35 // pred_check_branch
          %424 = sbr.rel (%p422) target = $region44
        $region43: #{tpu_custom_call.1} parent=35 // pred_region
          %s425 = sand.u32 %s30, 1
          %s426 = scalar_lea.sflag [#allocation14], %s425
          %s427 = sand.u32 %s183, 1
          %s428 = smul.addr %s427, 4
          %s429 = scalar_lea.vmem [#allocation13], %s428
          %431 = vsyncadd %s426, 0
          %s432 = smul.addr %s37, 4
          %s433 = scalar_lea.hbm %s6, %s432
          %s435 = sshll.u32 %s433, 4
          %s436 = int_to_ptr.hbm [resolvable:$true] %s435
          %s437 = sshll.u32 %s429, 4
          %s438 = int_to_ptr.vmem [resolvable:$true] %s437
          %440 = dma.hbm_to_vmem [thread:$0]  %s436, 64, %s438, %s426
        $region44: #{tpu_custom_call.1} parent=35 // pred_fallthru
          _
        // Predicated region
        $region45: #{tpu_custom_call.1} parent=35 // pred_check
          %p441 = pneg %p219
        $region46: #{tpu_custom_call.1} parent=35 // pred_check_branch
          %443 = sbr.rel (%p441) target = $region48
        $region47: #{tpu_custom_call.1} parent=35 // pred_region
          %p444 = scmp.lt.s32.totalorder %s37, 1
          %s445 = scalar_select %p444, %s37, 1
          %s446 = smul.addr %s445, 2
          %s447 = smul.addr %s446, 4
          %s448 = scalar_lea.vmem %s7, %s447
        $region48: #{tpu_custom_call.1} parent=35 // pred_fallthru
          _
        // Predicated region
        $region49: #{tpu_custom_call.1} parent=35 // pred_check
          %p449 = pneg %p245
        $region50: #{tpu_custom_call.1} parent=35 // pred_check_branch
          %451 = sbr.rel (%p449) target = $region52
        $region51: #{tpu_custom_call.1} parent=35 // pred_region
          %s452 = sand.u32 %s30, 1
          %s453 = scalar_lea.sflag [#allocation14], %s452
          %s454 = sand.u32 %s235, 1
          %s455 = smul.addr %s454, 256
          %s456 = scalar_lea.vmem [#allocation15], %s455
          %458 = vsyncadd %s453, 0
          %s459 = smul.addr %s37, 64
          %s460 = smul.addr %s459, 4
          %s461 = scalar_lea.hbm %s8, %s460
          %s462 = sshll.u32 %s461, 4
          %s463 = int_to_ptr.hbm [resolvable:$true] %s462
          %s464 = sshll.u32 %s456, 4
          %s465 = int_to_ptr.vmem [resolvable:$true] %s464
          %470 = dma.hbm_to_vmem [thread:$0]  %s463, 4096, %s465, %s453, 128, 128, 8
        $region52: #{tpu_custom_call.1} parent=35 // pred_fallthru
          _
        // Predicated region
        $region53: #{tpu_custom_call.1} parent=35 // pred_check
          %p471 = pneg %p271
        $region54: #{tpu_custom_call.1} parent=35 // pred_check_branch
          %473 = sbr.rel (%p471) target = $region56
        $region55: #{tpu_custom_call.1} parent=35 // pred_region
          %s474 = sand.u32 %s30, 1
          %s475 = scalar_lea.sflag [#allocation17], %s474
          %s476 = sand.u32 %s261, 1
          %s477 = smul.addr %s476, 256
          %s478 = scalar_lea.vmem [#allocation16], %s477
          %480 = vsyncadd %s475, 0
          %s481 = smul.addr %s37, 64
          %s482 = smul.addr %s481, 4
          %s483 = scalar_lea.hbm %s9, %s482
          %s484 = sshll.u32 %s483, 4
          %s485 = int_to_ptr.hbm [resolvable:$true] %s484
          %s486 = sshll.u32 %s478, 4
          %s487 = int_to_ptr.vmem [resolvable:$true] %s486
          %492 = dma.hbm_to_vmem [thread:$0]  %s485, 4096, %s487, %s475, 128, 128, 8
        $region56: #{tpu_custom_call.1} parent=35 // pred_fallthru
          _
        // Predicated region
        $region57: #{tpu_custom_call.1} parent=35 // pred_check
          %p493 = pneg %p299
        $region58: #{tpu_custom_call.1} parent=35 // pred_check_branch
          %495 = sbr.rel (%p493) target = $region60
        $region59: #{tpu_custom_call.1} parent=35 // pred_region
          %s496 = sand.u32 %s30, 1
          %s497 = scalar_lea.sflag [#allocation17], %s496
          %s498 = sand.u32 %s289, 1
          %s499 = smul.addr %s498, 512
          %s500 = scalar_lea.vmem [#allocation18], %s499
          %s501 = smul.u32 2, %s38
          %503 = vsyncadd %s497, 0
          %s504 = smul.addr %s37, 256
          %s505 = sadd.s32 %s501, %s504
          %s506 = smul.addr %s505, 4
          %s507 = scalar_lea.hbm %s10, %s506
          %s508 = sshll.u32 %s507, 4
          %s509 = int_to_ptr.hbm [resolvable:$true] %s508
          %s510 = sshll.u32 %s500, 4
          %s511 = int_to_ptr.vmem [resolvable:$true] %s510
          %516 = dma.hbm_to_vmem [thread:$0]  %s509, 8192, %s511, %s497, 256, 128, 8
        $region60: #{tpu_custom_call.1} parent=35 // pred_fallthru
          _
        // Predicated region
        $region61: #{tpu_custom_call.1} parent=35 // pred_check
          %p517 = pneg %p327
        $region62: #{tpu_custom_call.1} parent=35 // pred_check_branch
          %519 = sbr.rel (%p517) target = $region64
        $region63: #{tpu_custom_call.1} parent=35 // pred_region
          %s520 = sand.u32 %s317, 1
          %s521 = scalar_lea.sflag [#allocation20], %s520
          %s522 = sand.u32 %s317, 1
          %s523 = smul.addr %s522, 256
          %s524 = scalar_lea.vmem [#allocation19], %s523
          %s525 = smul.u32 32, %s38
          %527 = vsyncadd %s521, 0
          %s528 = smul.addr %s525, 2
          %s529 = smul.addr %s37, 128
          %s530 = sadd.s32 %s528, %s529
          %s531 = smul.addr %s530, 4
          %s532 = scalar_lea.hbm %s11, %s531
          %s533 = sshll.u32 %s532, 4
          %s534 = int_to_ptr.hbm [resolvable:$true] %s533
          %s535 = sshll.u32 %s524, 4
          %s536 = int_to_ptr.vmem [resolvable:$true] %s535
          %541 = dma.hbm_to_vmem [thread:$0]  %s534, 4096, %s536, %s521, 128, 128, 8
        $region64: #{tpu_custom_call.1} parent=35 // pred_fallthru
          _
      $region36: #{tpu_custom_call.1} parent=5 // pred_fallthru
        _
      %p542 = scmp.le.s32.totalorder 1, %s30
      %p543 = scmp.lt.s32.totalorder %s30, 5
      %p544 = pnand %p542, %p543
      %p545 = pneg %p544
      // Predicated region
      $region65: #{tpu_custom_call.1} parent=5 // pred_check
        _
      $region66: #{tpu_custom_call.1} parent=5 // pred_check_branch
        %547 = sbr.rel (%p544) target = $region68
      $region67: #{tpu_custom_call.1} parent=5 // pred_region
        %s548 = ssub.s32 %s30, 1
        // Predicated region
        $region69: #{tpu_custom_call.1} parent=67 // pred_check
          %p549 = pneg %p84
        $region70: #{tpu_custom_call.1} parent=67 // pred_check_branch
          %551 = sbr.rel (%p549) target = $region72
        $region71: #{tpu_custom_call.1} parent=67 // pred_region
          %553 = dma.done [#allocation8], 256
        $region72: #{tpu_custom_call.1} parent=67 // pred_fallthru
          _
        // Predicated region
        $region73: #{tpu_custom_call.1} parent=67 // pred_check
          %p554 = pneg %p126
        $region74: #{tpu_custom_call.1} parent=67 // pred_check_branch
          %556 = sbr.rel (%p554) target = $region76
        $region75: #{tpu_custom_call.1} parent=67 // pred_region
          %558 = dma.done [#allocation11], 128
        $region76: #{tpu_custom_call.1} parent=67 // pred_fallthru
          _
        // Predicated region
        $region77: #{tpu_custom_call.1} parent=67 // pred_check
          %p559 = pneg %p147
        $region78: #{tpu_custom_call.1} parent=67 // pred_check_branch
          %561 = sbr.rel (%p559) target = $region80
        $region79: #{tpu_custom_call.1} parent=67 // pred_region
          %563 = dma.done [#allocation11], 128
        $region80: #{tpu_custom_call.1} parent=67 // pred_fallthru
          _
        %s564 = sand.u32 %s35, 1
        %s565 = scalar_lea.sflag [#allocation14], %s564
        %s566 = sand.u32 %s186, 1
        %s567 = smul.addr %s566, 4
        %s568 = scalar_lea.vmem [#allocation13], %s567
        // Predicated region
        $region81: #{tpu_custom_call.1} parent=67 // pred_check
          %p569 = pneg %p199
        $region82: #{tpu_custom_call.1} parent=67 // pred_check_branch
          %571 = sbr.rel (%p569) target = $region84
        $region83: #{tpu_custom_call.1} parent=67 // pred_region
          %573 = dma.done %s565, 64
        $region84: #{tpu_custom_call.1} parent=67 // pred_fallthru
          _
        %s574 = sand.u32 %s35, 1
        %s575 = scalar_lea.sflag [#allocation14], %s574
        %s576 = sand.u32 %s238, 1
        %s577 = smul.addr %s576, 256
        %s578 = scalar_lea.vmem [#allocation15], %s577
        // Predicated region
        $region85: #{tpu_custom_call.1} parent=67 // pred_check
          %p579 = pneg %p251
        $region86: #{tpu_custom_call.1} parent=67 // pred_check_branch
          %581 = sbr.rel (%p579) target = $region88
        $region87: #{tpu_custom_call.1} parent=67 // pred_region
          %583 = dma.done %s575, 4096
        $region88: #{tpu_custom_call.1} parent=67 // pred_fallthru
          _
        %s584 = sand.u32 %s35, 1
        %s585 = scalar_lea.sflag [#allocation17], %s584
        %s586 = sand.u32 %s264, 1
        %s587 = smul.addr %s586, 256
        %s588 = scalar_lea.vmem [#allocation16], %s587
        // Predicated region
        $region89: #{tpu_custom_call.1} parent=67 // pred_check
          %p589 = pneg %p277
        $region90: #{tpu_custom_call.1} parent=67 // pred_check_branch
          %591 = sbr.rel (%p589) target = $region92
        $region91: #{tpu_custom_call.1} parent=67 // pred_region
          %593 = dma.done %s585, 4096
        $region92: #{tpu_custom_call.1} parent=67 // pred_fallthru
          _
        %s594 = sand.u32 %s35, 1
        %s595 = scalar_lea.sflag [#allocation17], %s594
        %s596 = sand.u32 %s292, 1
        %s597 = smul.addr %s596, 512
        %s598 = scalar_lea.vmem [#allocation18], %s597
        // Predicated region
        $region93: #{tpu_custom_call.1} parent=67 // pred_check
          %p599 = pneg %p305
        $region94: #{tpu_custom_call.1} parent=67 // pred_check_branch
          %601 = sbr.rel (%p599) target = $region96
        $region95: #{tpu_custom_call.1} parent=67 // pred_region
          %603 = dma.done %s595, 8192
        $region96: #{tpu_custom_call.1} parent=67 // pred_fallthru
          _
        %s604 = sand.u32 %s320, 1
        %s605 = scalar_lea.sflag [#allocation20], %s604
        %s606 = sand.u32 %s320, 1
        %s607 = smul.addr %s606, 256
        %s608 = scalar_lea.vmem [#allocation19], %s607
        // Predicated region
        $region97: #{tpu_custom_call.1} parent=67 // pred_check
          %p609 = pneg %p333
        $region98: #{tpu_custom_call.1} parent=67 // pred_check_branch
          %611 = sbr.rel (%p609) target = $region100
        $region99: #{tpu_custom_call.1} parent=67 // pred_region
          %613 = dma.done %s605, 4096
        $region100: #{tpu_custom_call.1} parent=67 // pred_fallthru
          _
        %p614 = pneg %p63
        %p615 = pneg %p60
        %p616 = pneg %p84
        %p617 = pneg %p81
        %p618 = pneg %p105
        %p619 = pneg %p102
        %p620 = pneg %p126
        %p621 = pneg %p123
        %p622 = pneg %p147
        %p623 = pneg %p144
        %p624 = scmp.lt.s32.totalorder %s39, 1
        %s625 = scalar_select %p624, %s39, 1
        %s626 = smul.addr %s625, 4
        %s627 = scalar_lea.vmem %s5, %s626
        %p628 = pneg %p173
        %p629 = pneg %p170
        %s630 = sand.u32 %s35, 1
        %s631 = scalar_lea.sflag [#allocation14], %s630
        %s632 = sand.u32 %s186, 1
        %s633 = smul.addr %s632, 4
        %s634 = scalar_lea.vmem [#allocation13], %s633
        %p635 = pneg %p199
        %p636 = pneg %p196
        %p637 = scmp.lt.s32.totalorder %s39, 1
        %s638 = scalar_select %p637, %s39, 1
        %s639 = smul.addr %s638, 2
        %s640 = smul.addr %s639, 4
        %s641 = scalar_lea.vmem %s7, %s640
        %p642 = pneg %p225
        %p643 = pneg %p222
        %s644 = sand.u32 %s35, 1
        %s645 = scalar_lea.sflag [#allocation14], %s644
        %s646 = sand.u32 %s238, 1
        %s647 = smul.addr %s646, 256
        %s648 = scalar_lea.vmem [#allocation15], %s647
        %p649 = pneg %p251
        %p650 = pneg %p248
        %s651 = sand.u32 %s35, 1
        %s652 = scalar_lea.sflag [#allocation17], %s651
        %s653 = sand.u32 %s264, 1
        %s654 = smul.addr %s653, 256
        %s655 = scalar_lea.vmem [#allocation16], %s654
        %p656 = pneg %p277
        %p657 = pneg %p274
        %s658 = sand.u32 %s35, 1
        %s659 = scalar_lea.sflag [#allocation17], %s658
        %s660 = sand.u32 %s292, 1
        %s661 = smul.addr %s660, 512
        %s662 = scalar_lea.vmem [#allocation18], %s661
        %p663 = pneg %p305
        %p664 = pneg %p302
        %s665 = sand.u32 %s320, 1
        %s666 = scalar_lea.sflag [#allocation20], %s665
        %s667 = sand.u32 %s320, 1
        %s668 = smul.addr %s667, 256
        %s669 = scalar_lea.vmem [#allocation19], %s668
        %p670 = pneg %p333
        %p671 = pneg %p330
        %p672 = pneg %p354
        %p673 = pneg %p351
        %p674 = scmp.lt.s32.totalorder %s39, 1
        %s675 = scalar_select %p674, %s39, 1
        %s676 = smul.addr %s675, 4
        %s677 = scalar_lea.vmem %s5, %s676
        %p678 = scmp.lt.s32.totalorder %s39, 1
        %s679 = scalar_select %p678, %s39, 1
        %s680 = smul.addr %s679, 2
        %s681 = smul.addr %s680, 4
        %s682 = scalar_lea.vmem %s7, %s681
        %s683 = smul.u32 2, %s40
        %s684 = smul.u32 32, %s40
        %p686 = scmp.eq.s32.totalorder %s39, 0
        %p687 = scmp.eq.s32.totalorder %s40, 0
        %p688 = pnand %p686, %p687
        %p689 = pneg %p688
        // Predicated region
        $region101: #{tpu_custom_call.1} parent=67 // pred_check
          _
        $region102: #{tpu_custom_call.1} parent=67 // pred_check_branch
          %691 = sbr.rel (%p688) target = $region104
        $region103: #{tpu_custom_call.1} parent=67 // pred_region
          %v692 = vld [vmem:[%s0] sm:$0xff]
          %v693 = vld [vmem:[%s0 + $0x8] sm:$0xff]
          %694 = vst [vmem:[#allocation2] sm:$0xff] %v692
          %695 = vst [vmem:[#allocation2 + $0x8] sm:$0xff] %v693
          %v696 = vld [vmem:[#allocation7] sm:$0xff]
          %v697 = vld [vmem:[#allocation7 + $0x8] sm:$0xff]
          %698 = vst [vmem:[#allocation3] sm:$0xff] %v696
          %699 = vst [vmem:[#allocation3 + $0x8] sm:$0xff] %v697
        $region104: #{tpu_custom_call.1} parent=67 // pred_fallthru
          _
        // Predicated region
        $region105: #{tpu_custom_call.1} parent=67 // pred_check
          %p700 = pneg %p687
        $region106: #{tpu_custom_call.1} parent=67 // pred_check_branch
          %702 = sbr.rel (%p700) target = $region108
        $region107: #{tpu_custom_call.1} parent=67 // pred_region
          %v703 = vld [vmem:[#allocation2] sm:$0xff]
          %v704 = vld [vmem:[#allocation2 + $0x8] sm:$0xff]
          %v705 = vld [vmem:[#allocation3] sm:$0xff]
          %v706 = vld [vmem:[#allocation3 + $0x8] sm:$0xff]
          %v707 = vadd.f32 %v703, %v705
          %v708 = vadd.f32 %v704, %v706
          %v709 = vmul.f32 %v707, %v707
          %v710 = vmul.f32 %v708, %v708
          %v711 = vadd.f32 %v709, %v710
          %712 = vadd.xlane.f32.xlu0 %v711
          %v713 = vpop.xlane.xlu0 %712
          %v714 = vrcp.pop 256.0
          %v715 = vmul.f32 256.0, %v714
          %v716 = vsub.f32 1.0, %v715
          %v717 = vmul.f32 %v714, %v716
          %v718 = vadd.f32 %v714, %v717
          %vm719 = vweird.f32 %v714
          %v720 = vsel %vm719, %v714, %v718
          %v721 = vmul.f32 %v713, %v720
          %v722 = vadd.f32 %v721, 1e-05
          %v723 = vrsqrt.pop %v722
          %v724 = vmul.f32 %v723, %v722
          %v725 = vmul.f32 %v724, %v723
          %v726 = vmul.f32 0.5, %v725
          %v727 = vsub.f32 1.5, %v726
          %v728 = vmul.f32 %v723, %v727
          %vm729 = vweird.f32 %v722
          %vm730 = vweird.f32 %v723
          %vm731 = vmor %vm729, %vm730
          %v732 = vsel %vm731, %v723, %v728
          %v733 = vmul.f32 %v707, %v732
          %v734 = vmul.f32 %v708, %v732
          %v735 = vld [vmem:[%s682] ss:$4 sm:$0x3]
          %v737 = vperm.slane %v735, 0
          %v738 = vperm.slane %v735, 1
          %v741 = vmul.f32 %v733, %v737
          %v742 = vmul.f32 %v734, %v738
          %v743 = vpack.c.bf16 %v741, %v741
          %v744 = vpack.c.bf16 %v742, %v742
          %v745 = vld [vmem:[%s578] sm:$0xff]
          %v746 = vld [vmem:[%s578 + $0x8] sm:$0xff]
          %v747 = vld [vmem:[%s578 + $0x10] sm:$0xff]
          %v748 = vld [vmem:[%s578 + $0x18] sm:$0xff]
          %v749 = vld [vmem:[%s578 + $0x20] sm:$0xff]
          %v750 = vld [vmem:[%s578 + $0x28] sm:$0xff]
          %v751 = vld [vmem:[%s578 + $0x30] sm:$0xff]
          %v752 = vld [vmem:[%s578 + $0x38] sm:$0xff]
          %v753 = vld [vmem:[%s578 + $0x40] sm:$0xff]
          %v754 = vld [vmem:[%s578 + $0x48] sm:$0xff]
          %v755 = vld [vmem:[%s578 + $0x50] sm:$0xff]
          %v756 = vld [vmem:[%s578 + $0x58] sm:$0xff]
          %v757 = vld [vmem:[%s578 + $0x60] sm:$0xff]
          %v758 = vld [vmem:[%s578 + $0x68] sm:$0xff]
          %v759 = vld [vmem:[%s578 + $0x70] sm:$0xff]
          %v760 = vld [vmem:[%s578 + $0x78] sm:$0xff]
          %v761 = vld [vmem:[%s578 + $0x80] sm:$0xff]
          %v762 = vld [vmem:[%s578 + $0x88] sm:$0xff]
          %v763 = vld [vmem:[%s578 + $0x90] sm:$0xff]
          %v764 = vld [vmem:[%s578 + $0x98] sm:$0xff]
          %v765 = vld [vmem:[%s578 + $0xa0] sm:$0xff]
          %v766 = vld [vmem:[%s578 + $0xa8] sm:$0xff]
          %v767 = vld [vmem:[%s578 + $0xb0] sm:$0xff]
          %v768 = vld [vmem:[%s578 + $0xb8] sm:$0xff]
          %v769 = vld [vmem:[%s578 + $0xc0] sm:$0xff]
          %v770 = vld [vmem:[%s578 + $0xc8] sm:$0xff]
          %v771 = vld [vmem:[%s578 + $0xd0] sm:$0xff]
          %v772 = vld [vmem:[%s578 + $0xd8] sm:$0xff]
          %v773 = vld [vmem:[%s578 + $0xe0] sm:$0xff]
          %v774 = vld [vmem:[%s578 + $0xe8] sm:$0xff]
          %v775 = vld [vmem:[%s578 + $0xf0] sm:$0xff]
          %v776 = vld [vmem:[%s578 + $0xf8] sm:$0xff]
          %v809 = vunpack.c.l.b16 %v745
          %v810 = vunpack.c.h.b16 %v745
          %v811 = vunpack.c.l.b16 %v746
          %v812 = vunpack.c.h.b16 %v746
          %v813 = vunpack.c.l.b16 %v747
          %v814 = vunpack.c.h.b16 %v747
          %v815 = vunpack.c.l.b16 %v748
          %v816 = vunpack.c.h.b16 %v748
          %v817 = vunpack.c.l.b16 %v749
          %v818 = vunpack.c.h.b16 %v749
          %v819 = vunpack.c.l.b16 %v750
          %v820 = vunpack.c.h.b16 %v750
          %v821 = vunpack.c.l.b16 %v751
          %v822 = vunpack.c.h.b16 %v751
          %v823 = vunpack.c.l.b16 %v752
          %v824 = vunpack.c.h.b16 %v752
          %v825 = vunpack.c.l.b16 %v753
          %v826 = vunpack.c.h.b16 %v753
          %v827 = vunpack.c.l.b16 %v754
          %v828 = vunpack.c.h.b16 %v754
          %v829 = vunpack.c.l.b16 %v755
          %v830 = vunpack.c.h.b16 %v755
          %v831 = vunpack.c.l.b16 %v756
          %v832 = vunpack.c.h.b16 %v756
          %v833 = vunpack.c.l.b16 %v757
          %v834 = vunpack.c.h.b16 %v757
          %v835 = vunpack.c.l.b16 %v758
          %v836 = vunpack.c.h.b16 %v758
          %v837 = vunpack.c.l.b16 %v759
          %v838 = vunpack.c.h.b16 %v759
          %v839 = vunpack.c.l.b16 %v760
          %v840 = vunpack.c.h.b16 %v760
          %v841 = vunpack.c.l.b16 %v761
          %v842 = vunpack.c.h.b16 %v761
          %v843 = vunpack.c.l.b16 %v762
          %v844 = vunpack.c.h.b16 %v762
          %v845 = vunpack.c.l.b16 %v763
          %v846 = vunpack.c.h.b16 %v763
          %v847 = vunpack.c.l.b16 %v764
          %v848 = vunpack.c.h.b16 %v764
          %v849 = vunpack.c.l.b16 %v765
          %v850 = vunpack.c.h.b16 %v765
          %v851 = vunpack.c.l.b16 %v766
          %v852 = vunpack.c.h.b16 %v766
          %v853 = vunpack.c.l.b16 %v767
          %v854 = vunpack.c.h.b16 %v767
          %v855 = vunpack.c.l.b16 %v768
          %v856 = vunpack.c.h.b16 %v768
          %v857 = vunpack.c.l.b16 %v769
          %v858 = vunpack.c.h.b16 %v769
          %v859 = vunpack.c.l.b16 %v770
          %v860 = vunpack.c.h.b16 %v770
          %v861 = vunpack.c.l.b16 %v771
          %v862 = vunpack.c.h.b16 %v771
          %v863 = vunpack.c.l.b16 %v772
          %v864 = vunpack.c.h.b16 %v772
          %v865 = vunpack.c.l.b16 %v773
          %v866 = vunpack.c.h.b16 %v773
          %v867 = vunpack.c.l.b16 %v774
          %v868 = vunpack.c.h.b16 %v774
          %v869 = vunpack.c.l.b16 %v775
          %v870 = vunpack.c.h.b16 %v775
          %v871 = vunpack.c.l.b16 %v776
          %v872 = vunpack.c.h.b16 %v776
          %v873 = vpack.c.b16 %v811, %v809
          %v874 = vpack.c.b16 %v812, %v810
          %v875 = vpack.c.b16 %v815, %v813
          %v876 = vpack.c.b16 %v816, %v814
          %v877 = vpack.c.b16 %v819, %v817
          %v878 = vpack.c.b16 %v820, %v818
          %v879 = vpack.c.b16 %v823, %v821
          %v880 = vpack.c.b16 %v824, %v822
          %v881 = vpack.c.b16 %v827, %v825
          %v882 = vpack.c.b16 %v828, %v826
          %v883 = vpack.c.b16 %v831, %v829
          %v884 = vpack.c.b16 %v832, %v830
          %v885 = vpack.c.b16 %v835, %v833
          %v886 = vpack.c.b16 %v836, %v834
          %v887 = vpack.c.b16 %v839, %v837
          %v888 = vpack.c.b16 %v840, %v838
          %v889 = vpack.c.b16 %v843, %v841
          %v890 = vpack.c.b16 %v844, %v842
          %v891 = vpack.c.b16 %v847, %v845
          %v892 = vpack.c.b16 %v848, %v846
          %v893 = vpack.c.b16 %v851, %v849
          %v894 = vpack.c.b16 %v852, %v850
          %v895 = vpack.c.b16 %v855, %v853
          %v896 = vpack.c.b16 %v856, %v854
          %v897 = vpack.c.b16 %v859, %v857
          %v898 = vpack.c.b16 %v860, %v858
          %v899 = vpack.c.b16 %v863, %v861
          %v900 = vpack.c.b16 %v864, %v862
          %v901 = vpack.c.b16 %v867, %v865
          %v902 = vpack.c.b16 %v868, %v866
          %v903 = vpack.c.b16 %v871, %v869
          %v904 = vpack.c.b16 %v872, %v870
          %937 = vmatpush.bf16.msra.mxu0 %v887
          %938 = vmatpush.bf16.msra.mxu0 %v885
          %939 = vmatpush.bf16.msra.mxu0 %v883
          %940 = vmatpush.bf16.msra.mxu0 %v881
          %941 = vmatpush.bf16.msra.mxu0 %v879
          %942 = vmatpush.bf16.msra.mxu0 %v877
          %943 = vmatpush.bf16.msra.mxu0 %v875
          %944 = vmatpush.bf16.msra.mxu0 %v873
          %945 = vmatmul.bf16.gmra.mxu0 %v743
          %v946 = vpop.f32.mrf.mxu0
          %v947 = vadd.f32 0.0, %v946
          %v948 = vpop.f32.mrf.mxu0
          %949 = vdwg.mxu0
          %950 = vmatpush.bf16.msra.mxu0 %v903
          %951 = vmatpush.bf16.msra.mxu0 %v901
          %952 = vmatpush.bf16.msra.mxu0 %v899
          %953 = vmatpush.bf16.msra.mxu0 %v897
          %954 = vmatpush.bf16.msra.mxu0 %v895
          %955 = vmatpush.bf16.msra.mxu0 %v893
          %956 = vmatpush.bf16.msra.mxu0 %v891
          %957 = vmatpush.bf16.msra.mxu0 %v889
          %958 = vmatmul.bf16.gmra.mxu0 %v744
          %v959 = vpop.f32.mrf.mxu0
          %v960 = vadd.f32 %v947, %v959
          %v961 = vpop.f32.mrf.mxu0
          %962 = vdwg.mxu0
          %963 = vmatpush.bf16.msra.mxu0 %v888
          %964 = vmatpush.bf16.msra.mxu0 %v886
          %965 = vmatpush.bf16.msra.mxu0 %v884
          %966 = vmatpush.bf16.msra.mxu0 %v882
          %967 = vmatpush.bf16.msra.mxu0 %v880
          %968 = vmatpush.bf16.msra.mxu0 %v878
          %969 = vmatpush.bf16.msra.mxu0 %v876
          %970 = vmatpush.bf16.msra.mxu0 %v874
          %971 = vmatmul.bf16.gmra.mxu0 %v743
          %v972 = vpop.f32.mrf.mxu0
          %v973 = vadd.f32 0.0, %v972
          %v974 = vpop.f32.mrf.mxu0
          %975 = vdwg.mxu0
          %976 = vmatpush.bf16.msra.mxu0 %v904
          %977 = vmatpush.bf16.msra.mxu0 %v902
          %978 = vmatpush.bf16.msra.mxu0 %v900
          %979 = vmatpush.bf16.msra.mxu0 %v898
          %980 = vmatpush.bf16.msra.mxu0 %v896
          %981 = vmatpush.bf16.msra.mxu0 %v894
          %982 = vmatpush.bf16.msra.mxu0 %v892
          %983 = vmatpush.bf16.msra.mxu0 %v890
          %984 = vmatmul.bf16.gmra.mxu0 %v744
          %v985 = vpop.f32.mrf.mxu0
          %v986 = vadd.f32 %v973, %v985
          %v987 = vpop.f32.mrf.mxu0
          %988 = vdwg.mxu0
          %v989 = vld [vmem:[%s2] sm:$0xff]
          %v990 = vld [vmem:[#allocation10] sm:$0xff]
          %v991 = vld [vmem:[#allocation12] sm:$0xff]
          %v992 = vmul.f32 %v960, %v989
          %993 = vrot.lane.b32.xlu0 %v960, 64
          %v994 = vpop.permute.xlu0 %993
          %v995 = vmul.f32 %v994, %v990
          %v996 = vadd.f32 %v992, %v995
          %v997 = vld [vmem:[%s677] sm:$0xf]
          %v998 = vld [vmem:[%s568] sm:$0xf]
          %v999 = vpack.c.bf16 %v996, %v996
          %1000 = vmatpush.bf16.xpose.msra.mxu0 0
          %1001 = vmatpush.bf16.xpose.msra.mxu0 0
          %1002 = vmatpush.bf16.xpose.msra.mxu0 0
          %1003 = vmatpush.bf16.xpose.msra.mxu0 0
          %1004 = vmatpush.bf16.xpose.msra.mxu0 0
          %1005 = vmatpush.bf16.xpose.msra.mxu0 0
          %1006 = vmatpush.bf16.xpose.msra.mxu0 0
          %1007 = vmatpush.bf16.xpose.msra.mxu0 %v997
          %1008 = vmatmul.bf16.gmra.mxu0 %v999
          %v1009 = vpop.f32.mrf.mxu0
          %v1010 = vadd.f32 0.0, %v1009
          %v1011 = vpop.f32.mrf.mxu0
          %1012 = vdwg.mxu0
          %v1013 = vmul.f32 %v1010, 0.088388346
          %v1014 = vadd.f32 %v1013, %v991
          %vm1015 = vcmask 64512
          %v1016 = vsel %vm1015, %v1014, -inf
          %1017 = vmax.xlane.f32.xlu0 %v1016
          %v1018 = vpop.xlane.xlu0 %1017
          %v1019 = vsub.f32 %v1014, %v1018
          %v1020 = vmul.f32 %v1019, 1.442695
          %v1021 = vpow.pop %v1020
          %v1022 = vsel %vm1015, %v1021, 0.0
          %1023 = vadd.xlane.f32.xlu0 %v1022
          %v1024 = vpop.xlane.xlu0 %1023
          %v1025 = vrcp.pop %v1024
          %v1026 = vmul.f32 %v1021, %v1025
          %v1027 = vpack.c.bf16 %v1026, %v1026
          %v1029 = vsel %vm1015, %v1027, 0
          %vm1031 = vcmask 1043456
          %v1033 = vsel %vm1031, %v998, 0
          %1035 = vmatpush.bf16.msra.mxu0 0
          %1036 = vmatpush.bf16.msra.mxu0 0
          %1037 = vmatpush.bf16.msra.mxu0 0
          %1038 = vmatpush.bf16.msra.mxu0 0
          %1039 = vmatpush.bf16.msra.mxu0 0
          %1040 = vmatpush.bf16.msra.mxu0 0
          %1041 = vmatpush.bf16.msra.mxu0 0
          %1042 = vmatpush.bf16.msra.mxu0 %v1033
          %1043 = vmatmul.bf16.gmra.mxu0 %v1029
          %v1044 = vpop.f32.mrf.mxu0
          %v1045 = vadd.f32 0.0, %v1044
          %v1046 = vpop.f32.mrf.mxu0
          %1047 = vdwg.mxu0
          %v1048 = vpack.c.bf16 %v1045, %v1045
          %1049 = vst [vmem:[#allocation5] sm:$0xf] %v1048
          %v1050 = vmul.f32 %v986, %v989
          %1051 = vrot.lane.b32.xlu0 %v986, 64
          %v1052 = vpop.permute.xlu0 %1051
          %v1053 = vmul.f32 %v1052, %v990
          %v1054 = vadd.f32 %v1050, %v1053
          %v1055 = vld [vmem:[%s677] sm:$0xf]
          %v1056 = vld [vmem:[%s568] sm:$0xf]
          %v1057 = vpack.c.bf16 %v1054, %v1054
          %1058 = vmatpush.bf16.xpose.msra.mxu0 0
          %1059 = vmatpush.bf16.xpose.msra.mxu0 0
          %1060 = vmatpush.bf16.xpose.msra.mxu0 0
          %1061 = vmatpush.bf16.xpose.msra.mxu0 0
          %1062 = vmatpush.bf16.xpose.msra.mxu0 0
          %1063 = vmatpush.bf16.xpose.msra.mxu0 0
          %1064 = vmatpush.bf16.xpose.msra.mxu0 0
          %1065 = vmatpush.bf16.xpose.msra.mxu0 %v1055
          %1066 = vmatmul.bf16.gmra.mxu0 %v1057
          %v1067 = vpop.f32.mrf.mxu0
          %v1068 = vadd.f32 0.0, %v1067
          %v1069 = vpop.f32.mrf.mxu0
          %1070 = vdwg.mxu0
          %v1071 = vmul.f32 %v1068, 0.088388346
          %v1072 = vadd.f32 %v1071, %v991
          %v1073 = vsel %vm1015, %v1072, -inf
          %1074 = vmax.xlane.f32.xlu0 %v1073
          %v1075 = vpop.xlane.xlu0 %1074
          %v1076 = vsub.f32 %v1072, %v1075
          %v1077 = vmul.f32 %v1076, 1.442695
          %v1078 = vpow.pop %v1077
          %v1079 = vsel %vm1015, %v1078, 0.0
          %1080 = vadd.xlane.f32.xlu0 %v1079
          %v1081 = vpop.xlane.xlu0 %1080
          %v1082 = vrcp.pop %v1081
          %v1083 = vmul.f32 %v1078, %v1082
          %v1084 = vpack.c.bf16 %v1083, %v1083
          %v1086 = vsel %vm1015, %v1084, 0
          %v1089 = vsel %vm1031, %v1056, 0
          %1091 = vmatpush.bf16.msra.mxu0 0
          %1092 = vmatpush.bf16.msra.mxu0 0
          %1093 = vmatpush.bf16.msra.mxu0 0
          %1094 = vmatpush.bf16.msra.mxu0 0
          %1095 = vmatpush.bf16.msra.mxu0 0
          %1096 = vmatpush.bf16.msra.mxu0 0
          %1097 = vmatpush.bf16.msra.mxu0 0
          %1098 = vmatpush.bf16.msra.mxu0 %v1089
          %1099 = vmatmul.bf16.gmra.mxu0 %v1086
          %v1100 = vpop.f32.mrf.mxu0
          %v1101 = vadd.f32 0.0, %v1100
          %v1102 = vpop.f32.mrf.mxu0
          %1103 = vdwg.mxu0
          %v1104 = vpack.c.bf16 %v1101, %v1101
          %1105 = vst [vmem:[#allocation5 + $0x4] sm:$0xf] %v1104
          %v1106 = vld [vmem:[#allocation5] sm:$0xff]
          %v1107 = vld [vmem:[%s588] sm:$0xff]
          %v1108 = vld [vmem:[%s588 + $0x8] sm:$0xff]
          %v1109 = vld [vmem:[%s588 + $0x10] sm:$0xff]
          %v1110 = vld [vmem:[%s588 + $0x18] sm:$0xff]
          %v1111 = vld [vmem:[%s588 + $0x20] sm:$0xff]
          %v1112 = vld [vmem:[%s588 + $0x28] sm:$0xff]
          %v1113 = vld [vmem:[%s588 + $0x30] sm:$0xff]
          %v1114 = vld [vmem:[%s588 + $0x38] sm:$0xff]
          %v1115 = vld [vmem:[%s588 + $0x40] sm:$0xff]
          %v1116 = vld [vmem:[%s588 + $0x48] sm:$0xff]
          %v1117 = vld [vmem:[%s588 + $0x50] sm:$0xff]
          %v1118 = vld [vmem:[%s588 + $0x58] sm:$0xff]
          %v1119 = vld [vmem:[%s588 + $0x60] sm:$0xff]
          %v1120 = vld [vmem:[%s588 + $0x68] sm:$0xff]
          %v1121 = vld [vmem:[%s588 + $0x70] sm:$0xff]
          %v1122 = vld [vmem:[%s588 + $0x78] sm:$0xff]
          %v1123 = vld [vmem:[%s588 + $0x80] sm:$0xff]
          %v1124 = vld [vmem:[%s588 + $0x88] sm:$0xff]
          %v1125 = vld [vmem:[%s588 + $0x90] sm:$0xff]
          %v1126 = vld [vmem:[%s588 + $0x98] sm:$0xff]
          %v1127 = vld [vmem:[%s588 + $0xa0] sm:$0xff]
          %v1128 = vld [vmem:[%s588 + $0xa8] sm:$0xff]
          %v1129 = vld [vmem:[%s588 + $0xb0] sm:$0xff]
          %v1130 = vld [vmem:[%s588 + $0xb8] sm:$0xff]
          %v1131 = vld [vmem:[%s588 + $0xc0] sm:$0xff]
          %v1132 = vld [vmem:[%s588 + $0xc8] sm:$0xff]
          %v1133 = vld [vmem:[%s588 + $0xd0] sm:$0xff]
          %v1134 = vld [vmem:[%s588 + $0xd8] sm:$0xff]
          %v1135 = vld [vmem:[%s588 + $0xe0] sm:$0xff]
          %v1136 = vld [vmem:[%s588 + $0xe8] sm:$0xff]
          %v1137 = vld [vmem:[%s588 + $0xf0] sm:$0xff]
          %v1138 = vld [vmem:[%s588 + $0xf8] sm:$0xff]
          %v1140 = vunpack.c.l.b16 %v1106
          %v1141 = vunpack.c.h.b16 %v1106
          %v1142 = vpack.c.b16 %v1140, %v1140
          %v1143 = vpack.c.b16 %v1141, %v1141
          %v1178 = vunpack.c.l.b16 %v1107
          %v1179 = vunpack.c.h.b16 %v1107
          %v1180 = vunpack.c.l.b16 %v1108
          %v1181 = vunpack.c.h.b16 %v1108
          %v1182 = vunpack.c.l.b16 %v1109
          %v1183 = vunpack.c.h.b16 %v1109
          %v1184 = vunpack.c.l.b16 %v1110
          %v1185 = vunpack.c.h.b16 %v1110
          %v1186 = vunpack.c.l.b16 %v1111
          %v1187 = vunpack.c.h.b16 %v1111
          %v1188 = vunpack.c.l.b16 %v1112
          %v1189 = vunpack.c.h.b16 %v1112
          %v1190 = vunpack.c.l.b16 %v1113
          %v1191 = vunpack.c.h.b16 %v1113
          %v1192 = vunpack.c.l.b16 %v1114
          %v1193 = vunpack.c.h.b16 %v1114
          %v1194 = vunpack.c.l.b16 %v1115
          %v1195 = vunpack.c.h.b16 %v1115
          %v1196 = vunpack.c.l.b16 %v1116
          %v1197 = vunpack.c.h.b16 %v1116
          %v1198 = vunpack.c.l.b16 %v1117
          %v1199 = vunpack.c.h.b16 %v1117
          %v1200 = vunpack.c.l.b16 %v1118
          %v1201 = vunpack.c.h.b16 %v1118
          %v1202 = vunpack.c.l.b16 %v1119
          %v1203 = vunpack.c.h.b16 %v1119
          %v1204 = vunpack.c.l.b16 %v1120
          %v1205 = vunpack.c.h.b16 %v1120
          %v1206 = vunpack.c.l.b16 %v1121
          %v1207 = vunpack.c.h.b16 %v1121
          %v1208 = vunpack.c.l.b16 %v1122
          %v1209 = vunpack.c.h.b16 %v1122
          %v1210 = vunpack.c.l.b16 %v1123
          %v1211 = vunpack.c.h.b16 %v1123
          %v1212 = vunpack.c.l.b16 %v1124
          %v1213 = vunpack.c.h.b16 %v1124
          %v1214 = vunpack.c.l.b16 %v1125
          %v1215 = vunpack.c.h.b16 %v1125
          %v1216 = vunpack.c.l.b16 %v1126
          %v1217 = vunpack.c.h.b16 %v1126
          %v1218 = vunpack.c.l.b16 %v1127
          %v1219 = vunpack.c.h.b16 %v1127
          %v1220 = vunpack.c.l.b16 %v1128
          %v1221 = vunpack.c.h.b16 %v1128
          %v1222 = vunpack.c.l.b16 %v1129
          %v1223 = vunpack.c.h.b16 %v1129
          %v1224 = vunpack.c.l.b16 %v1130
          %v1225 = vunpack.c.h.b16 %v1130
          %v1226 = vunpack.c.l.b16 %v1131
          %v1227 = vunpack.c.h.b16 %v1131
          %v1228 = vunpack.c.l.b16 %v1132
          %v1229 = vunpack.c.h.b16 %v1132
          %v1230 = vunpack.c.l.b16 %v1133
          %v1231 = vunpack.c.h.b16 %v1133
          %v1232 = vunpack.c.l.b16 %v1134
          %v1233 = vunpack.c.h.b16 %v1134
          %v1234 = vunpack.c.l.b16 %v1135
          %v1235 = vunpack.c.h.b16 %v1135
          %v1236 = vunpack.c.l.b16 %v1136
          %v1237 = vunpack.c.h.b16 %v1136
          %v1238 = vunpack.c.l.b16 %v1137
          %v1239 = vunpack.c.h.b16 %v1137
          %v1240 = vunpack.c.l.b16 %v1138
          %v1241 = vunpack.c.h.b16 %v1138
          %v1242 = vpack.c.b16 %v1180, %v1178
          %v1243 = vpack.c.b16 %v1181, %v1179
          %v1244 = vpack.c.b16 %v1184, %v1182
          %v1245 = vpack.c.b16 %v1185, %v1183
          %v1246 = vpack.c.b16 %v1188, %v1186
          %v1247 = vpack.c.b16 %v1189, %v1187
          %v1248 = vpack.c.b16 %v1192, %v1190
          %v1249 = vpack.c.b16 %v1193, %v1191
          %v1250 = vpack.c.b16 %v1196, %v1194
          %v1251 = vpack.c.b16 %v1197, %v1195
          %v1252 = vpack.c.b16 %v1200, %v1198
          %v1253 = vpack.c.b16 %v1201, %v1199
          %v1254 = vpack.c.b16 %v1204, %v1202
          %v1255 = vpack.c.b16 %v1205, %v1203
          %v1256 = vpack.c.b16 %v1208, %v1206
          %v1257 = vpack.c.b16 %v1209, %v1207
          %v1258 = vpack.c.b16 %v1212, %v1210
          %v1259 = vpack.c.b16 %v1213, %v1211
          %v1260 = vpack.c.b16 %v1216, %v1214
          %v1261 = vpack.c.b16 %v1217, %v1215
          %v1262 = vpack.c.b16 %v1220, %v1218
          %v1263 = vpack.c.b16 %v1221, %v1219
          %v1264 = vpack.c.b16 %v1224, %v1222
          %v1265 = vpack.c.b16 %v1225, %v1223
          %v1266 = vpack.c.b16 %v1228, %v1226
          %v1267 = vpack.c.b16 %v1229, %v1227
          %v1268 = vpack.c.b16 %v1232, %v1230
          %v1269 = vpack.c.b16 %v1233, %v1231
          %v1270 = vpack.c.b16 %v1236, %v1234
          %v1271 = vpack.c.b16 %v1237, %v1235
          %v1272 = vpack.c.b16 %v1240, %v1238
          %v1273 = vpack.c.b16 %v1241, %v1239
          %1306 = vmatpush.bf16.msra.mxu0 %v1256
          %1307 = vmatpush.bf16.msra.mxu0 %v1254
          %1308 = vmatpush.bf16.msra.mxu0 %v1252
          %1309 = vmatpush.bf16.msra.mxu0 %v1250
          %1310 = vmatpush.bf16.msra.mxu0 %v1248
          %1311 = vmatpush.bf16.msra.mxu0 %v1246
          %1312 = vmatpush.bf16.msra.mxu0 %v1244
          %1313 = vmatpush.bf16.msra.mxu0 %v1242
          %1314 = vmatmul.bf16.gmra.mxu0 %v1142
          %v1315 = vpop.f32.mrf.mxu0
          %v1316 = vadd.f32 %v707, %v1315
          %v1317 = vpop.f32.mrf.mxu0
          %1318 = vdwg.mxu0
          %1319 = vmatpush.bf16.msra.mxu0 %v1272
          %1320 = vmatpush.bf16.msra.mxu0 %v1270
          %1321 = vmatpush.bf16.msra.mxu0 %v1268
          %1322 = vmatpush.bf16.msra.mxu0 %v1266
          %1323 = vmatpush.bf16.msra.mxu0 %v1264
          %1324 = vmatpush.bf16.msra.mxu0 %v1262
          %1325 = vmatpush.bf16.msra.mxu0 %v1260
          %1326 = vmatpush.bf16.msra.mxu0 %v1258
          %1327 = vmatmul.bf16.gmra.mxu0 %v1143
          %v1328 = vpop.f32.mrf.mxu0
          %v1329 = vadd.f32 %v1316, %v1328
          %v1330 = vpop.f32.mrf.mxu0
          %1331 = vdwg.mxu0
          %1332 = vmatpush.bf16.msra.mxu0 %v1257
          %1333 = vmatpush.bf16.msra.mxu0 %v1255
          %1334 = vmatpush.bf16.msra.mxu0 %v1253
          %1335 = vmatpush.bf16.msra.mxu0 %v1251
          %1336 = vmatpush.bf16.msra.mxu0 %v1249
          %1337 = vmatpush.bf16.msra.mxu0 %v1247
          %1338 = vmatpush.bf16.msra.mxu0 %v1245
          %1339 = vmatpush.bf16.msra.mxu0 %v1243
          %1340 = vmatmul.bf16.gmra.mxu0 %v1142
          %v1341 = vpop.f32.mrf.mxu0
          %v1342 = vadd.f32 %v708, %v1341
          %v1343 = vpop.f32.mrf.mxu0
          %1344 = vdwg.mxu0
          %1345 = vmatpush.bf16.msra.mxu0 %v1273
          %1346 = vmatpush.bf16.msra.mxu0 %v1271
          %1347 = vmatpush.bf16.msra.mxu0 %v1269
          %1348 = vmatpush.bf16.msra.mxu0 %v1267
          %1349 = vmatpush.bf16.msra.mxu0 %v1265
          %1350 = vmatpush.bf16.msra.mxu0 %v1263
          %1351 = vmatpush.bf16.msra.mxu0 %v1261
          %1352 = vmatpush.bf16.msra.mxu0 %v1259
          %1353 = vmatmul.bf16.gmra.mxu0 %v1143
          %v1354 = vpop.f32.mrf.mxu0
          %v1355 = vadd.f32 %v1342, %v1354
          %v1356 = vpop.f32.mrf.mxu0
          %1357 = vdwg.mxu0
          %v1358 = vmul.f32 %v1329, %v1329
          %v1359 = vmul.f32 %v1355, %v1355
          %v1360 = vadd.f32 %v1358, %v1359
          %1361 = vadd.xlane.f32.xlu0 %v1360
          %v1362 = vpop.xlane.xlu0 %1361
          %v1363 = vmul.f32 %v1362, %v720
          %v1364 = vadd.f32 %v1363, 1e-05
          %v1365 = vrsqrt.pop %v1364
          %v1366 = vmul.f32 %v1365, %v1364
          %v1367 = vmul.f32 %v1366, %v1365
          %v1368 = vmul.f32 0.5, %v1367
          %v1369 = vsub.f32 1.5, %v1368
          %v1370 = vmul.f32 %v1365, %v1369
          %vm1371 = vweird.f32 %v1364
          %vm1372 = vweird.f32 %v1365
          %vm1373 = vmor %vm1371, %vm1372
          %v1374 = vsel %vm1373, %v1365, %v1370
          %v1375 = vmul.f32 %v1329, %v1374
          %v1376 = vmul.f32 %v1355, %v1374
          %s1377 = scalar_lea.vmem %s682, 1
          %v1378 = vld [vmem:[%s1377] ss:$4 sm:$0x3]
          %v1380 = vperm.slane %v1378, 0
          %v1381 = vperm.slane %v1378, 1
          %v1384 = vmul.f32 %v1375, %v1380
          %v1385 = vmul.f32 %v1376, %v1381
          %1386 = vst [vmem:[#allocation3] sm:$0xff] %v1329
          %1387 = vst [vmem:[#allocation3 + $0x8] sm:$0xff] %v1355
          %v1388 = vpack.c.bf16 %v1385, %v1384
          %1389 = vst [vmem:[#allocation4] sm:$0xff] %v1388
          %1390 = vst [vmem:[#allocation6] sm:$0xff] 0.0
          %1391 = vst [vmem:[#allocation6 + $0x8] sm:$0xff] 0.0
        $region108: #{tpu_custom_call.1} parent=67 // pred_fallthru
          _
        %v1392 = vld [vmem:[#allocation4] sm:$0xff]
        %v1393 = vld [vmem:[%s598] sm:$0xff]
        %v1394 = vld [vmem:[%s598 + $0x8] sm:$0xff]
        %v1395 = vld [vmem:[%s598 + $0x10] sm:$0xff]
        %v1396 = vld [vmem:[%s598 + $0x18] sm:$0xff]
        %v1397 = vld [vmem:[%s598 + $0x20] sm:$0xff]
        %v1398 = vld [vmem:[%s598 + $0x28] sm:$0xff]
        %v1399 = vld [vmem:[%s598 + $0x30] sm:$0xff]
        %v1400 = vld [vmem:[%s598 + $0x38] sm:$0xff]
        %v1401 = vld [vmem:[%s598 + $0x40] sm:$0xff]
        %v1402 = vld [vmem:[%s598 + $0x48] sm:$0xff]
        %v1403 = vld [vmem:[%s598 + $0x50] sm:$0xff]
        %v1404 = vld [vmem:[%s598 + $0x58] sm:$0xff]
        %v1405 = vld [vmem:[%s598 + $0x60] sm:$0xff]
        %v1406 = vld [vmem:[%s598 + $0x68] sm:$0xff]
        %v1407 = vld [vmem:[%s598 + $0x70] sm:$0xff]
        %v1408 = vld [vmem:[%s598 + $0x78] sm:$0xff]
        %v1409 = vld [vmem:[%s598 + $0x80] sm:$0xff]
        %v1410 = vld [vmem:[%s598 + $0x88] sm:$0xff]
        %v1411 = vld [vmem:[%s598 + $0x90] sm:$0xff]
        %v1412 = vld [vmem:[%s598 + $0x98] sm:$0xff]
        %v1413 = vld [vmem:[%s598 + $0xa0] sm:$0xff]
        %v1414 = vld [vmem:[%s598 + $0xa8] sm:$0xff]
        %v1415 = vld [vmem:[%s598 + $0xb0] sm:$0xff]
        %v1416 = vld [vmem:[%s598 + $0xb8] sm:$0xff]
        %v1417 = vld [vmem:[%s598 + $0xc0] sm:$0xff]
        %v1418 = vld [vmem:[%s598 + $0xc8] sm:$0xff]
        %v1419 = vld [vmem:[%s598 + $0xd0] sm:$0xff]
        %v1420 = vld [vmem:[%s598 + $0xd8] sm:$0xff]
        %v1421 = vld [vmem:[%s598 + $0xe0] sm:$0xff]
        %v1422 = vld [vmem:[%s598 + $0xe8] sm:$0xff]
        %v1423 = vld [vmem:[%s598 + $0xf0] sm:$0xff]
        %v1424 = vld [vmem:[%s598 + $0xf8] sm:$0xff]
        %v1426 = vunpack.c.l.b16 %v1392
        %v1427 = vunpack.c.h.b16 %v1392
        %v1428 = vpack.c.b16 %v1426, %v1426
        %v1429 = vpack.c.b16 %v1427, %v1427
        %v1464 = vunpack.c.l.b16 %v1393
        %v1465 = vunpack.c.h.b16 %v1393
        %v1466 = vunpack.c.l.b16 %v1394
        %v1467 = vunpack.c.h.b16 %v1394
        %v1468 = vunpack.c.l.b16 %v1395
        %v1469 = vunpack.c.h.b16 %v1395
        %v1470 = vunpack.c.l.b16 %v1396
        %v1471 = vunpack.c.h.b16 %v1396
        %v1472 = vunpack.c.l.b16 %v1397
        %v1473 = vunpack.c.h.b16 %v1397
        %v1474 = vunpack.c.l.b16 %v1398
        %v1475 = vunpack.c.h.b16 %v1398
        %v1476 = vunpack.c.l.b16 %v1399
        %v1477 = vunpack.c.h.b16 %v1399
        %v1478 = vunpack.c.l.b16 %v1400
        %v1479 = vunpack.c.h.b16 %v1400
        %v1480 = vunpack.c.l.b16 %v1401
        %v1481 = vunpack.c.h.b16 %v1401
        %v1482 = vunpack.c.l.b16 %v1402
        %v1483 = vunpack.c.h.b16 %v1402
        %v1484 = vunpack.c.l.b16 %v1403
        %v1485 = vunpack.c.h.b16 %v1403
        %v1486 = vunpack.c.l.b16 %v1404
        %v1487 = vunpack.c.h.b16 %v1404
        %v1488 = vunpack.c.l.b16 %v1405
        %v1489 = vunpack.c.h.b16 %v1405
        %v1490 = vunpack.c.l.b16 %v1406
        %v1491 = vunpack.c.h.b16 %v1406
        %v1492 = vunpack.c.l.b16 %v1407
        %v1493 = vunpack.c.h.b16 %v1407
        %v1494 = vunpack.c.l.b16 %v1408
        %v1495 = vunpack.c.h.b16 %v1408
        %v1496 = vunpack.c.l.b16 %v1409
        %v1497 = vunpack.c.h.b16 %v1409
        %v1498 = vunpack.c.l.b16 %v1410
        %v1499 = vunpack.c.h.b16 %v1410
        %v1500 = vunpack.c.l.b16 %v1411
        %v1501 = vunpack.c.h.b16 %v1411
        %v1502 = vunpack.c.l.b16 %v1412
        %v1503 = vunpack.c.h.b16 %v1412
        %v1504 = vunpack.c.l.b16 %v1413
        %v1505 = vunpack.c.h.b16 %v1413
        %v1506 = vunpack.c.l.b16 %v1414
        %v1507 = vunpack.c.h.b16 %v1414
        %v1508 = vunpack.c.l.b16 %v1415
        %v1509 = vunpack.c.h.b16 %v1415
        %v1510 = vunpack.c.l.b16 %v1416
        %v1511 = vunpack.c.h.b16 %v1416
        %v1512 = vunpack.c.l.b16 %v1417
        %v1513 = vunpack.c.h.b16 %v1417
        %v1514 = vunpack.c.l.b16 %v1418
        %v1515 = vunpack.c.h.b16 %v1418
        %v1516 = vunpack.c.l.b16 %v1419
        %v1517 = vunpack.c.h.b16 %v1419
        %v1518 = vunpack.c.l.b16 %v1420
        %v1519 = vunpack.c.h.b16 %v1420
        %v1520 = vunpack.c.l.b16 %v1421
        %v1521 = vunpack.c.h.b16 %v1421
        %v1522 = vunpack.c.l.b16 %v1422
        %v1523 = vunpack.c.h.b16 %v1422
        %v1524 = vunpack.c.l.b16 %v1423
        %v1525 = vunpack.c.h.b16 %v1423
        %v1526 = vunpack.c.l.b16 %v1424
        %v1527 = vunpack.c.h.b16 %v1424
        %v1528 = vpack.c.b16 %v1466, %v1464
        %v1529 = vpack.c.b16 %v1467, %v1465
        %v1530 = vpack.c.b16 %v1470, %v1468
        %v1531 = vpack.c.b16 %v1471, %v1469
        %v1532 = vpack.c.b16 %v1474, %v1472
        %v1533 = vpack.c.b16 %v1475, %v1473
        %v1534 = vpack.c.b16 %v1478, %v1476
        %v1535 = vpack.c.b16 %v1479, %v1477
        %v1536 = vpack.c.b16 %v1482, %v1480
        %v1537 = vpack.c.b16 %v1483, %v1481
        %v1538 = vpack.c.b16 %v1486, %v1484
        %v1539 = vpack.c.b16 %v1487, %v1485
        %v1540 = vpack.c.b16 %v1490, %v1488
        %v1541 = vpack.c.b16 %v1491, %v1489
        %v1542 = vpack.c.b16 %v1494, %v1492
        %v1543 = vpack.c.b16 %v1495, %v1493
        %v1544 = vpack.c.b16 %v1498, %v1496
        %v1545 = vpack.c.b16 %v1499, %v1497
        %v1546 = vpack.c.b16 %v1502, %v1500
        %v1547 = vpack.c.b16 %v1503, %v1501
        %v1548 = vpack.c.b16 %v1506, %v1504
        %v1549 = vpack.c.b16 %v1507, %v1505
        %v1550 = vpack.c.b16 %v1510, %v1508
        %v1551 = vpack.c.b16 %v1511, %v1509
        %v1552 = vpack.c.b16 %v1514, %v1512
        %v1553 = vpack.c.b16 %v1515, %v1513
        %v1554 = vpack.c.b16 %v1518, %v1516
        %v1555 = vpack.c.b16 %v1519, %v1517
        %v1556 = vpack.c.b16 %v1522, %v1520
        %v1557 = vpack.c.b16 %v1523, %v1521
        %v1558 = vpack.c.b16 %v1526, %v1524
        %v1559 = vpack.c.b16 %v1527, %v1525
        %1592 = vmatpush.bf16.msra.mxu0 %v1542
        %1593 = vmatpush.bf16.msra.mxu0 %v1540
        %1594 = vmatpush.bf16.msra.mxu0 %v1538
        %1595 = vmatpush.bf16.msra.mxu0 %v1536
        %1596 = vmatpush.bf16.msra.mxu0 %v1534
        %1597 = vmatpush.bf16.msra.mxu0 %v1532
        %1598 = vmatpush.bf16.msra.mxu0 %v1530
        %1599 = vmatpush.bf16.msra.mxu0 %v1528
        %1600 = vmatmul.bf16.gmra.mxu0 %v1428
        %v1601 = vpop.f32.mrf.mxu0
        %v1602 = vadd.f32 0.0, %v1601
        %v1603 = vpop.f32.mrf.mxu0
        %1604 = vdwg.mxu0
        %1605 = vmatpush.bf16.msra.mxu0 %v1558
        %1606 = vmatpush.bf16.msra.mxu0 %v1556
        %1607 = vmatpush.bf16.msra.mxu0 %v1554
        %1608 = vmatpush.bf16.msra.mxu0 %v1552
        %1609 = vmatpush.bf16.msra.mxu0 %v1550
        %1610 = vmatpush.bf16.msra.mxu0 %v1548
        %1611 = vmatpush.bf16.msra.mxu0 %v1546
        %1612 = vmatpush.bf16.msra.mxu0 %v1544
        %1613 = vmatmul.bf16.gmra.mxu0 %v1429
        %v1614 = vpop.f32.mrf.mxu0
        %v1615 = vadd.f32 %v1602, %v1614
        %v1616 = vpop.f32.mrf.mxu0
        %1617 = vdwg.mxu0
        %1618 = vmatpush.bf16.msra.mxu0 %v1543
        %1619 = vmatpush.bf16.msra.mxu0 %v1541
        %1620 = vmatpush.bf16.msra.mxu0 %v1539
        %1621 = vmatpush.bf16.msra.mxu0 %v1537
        %1622 = vmatpush.bf16.msra.mxu0 %v1535
        %1623 = vmatpush.bf16.msra.mxu0 %v1533
        %1624 = vmatpush.bf16.msra.mxu0 %v1531
        %1625 = vmatpush.bf16.msra.mxu0 %v1529
        %1626 = vmatmul.bf16.gmra.mxu0 %v1428
        %v1627 = vpop.f32.mrf.mxu0
        %v1628 = vadd.f32 0.0, %v1627
        %v1629 = vpop.f32.mrf.mxu0
        %1630 = vdwg.mxu0
        %1631 = vmatpush.bf16.msra.mxu0 %v1559
        %1632 = vmatpush.bf16.msra.mxu0 %v1557
        %1633 = vmatpush.bf16.msra.mxu0 %v1555
        %1634 = vmatpush.bf16.msra.mxu0 %v1553
        %1635 = vmatpush.bf16.msra.mxu0 %v1551
        %1636 = vmatpush.bf16.msra.mxu0 %v1549
        %1637 = vmatpush.bf16.msra.mxu0 %v1547
        %1638 = vmatpush.bf16.msra.mxu0 %v1545
        %1639 = vmatmul.bf16.gmra.mxu0 %v1429
        %v1640 = vpop.f32.mrf.mxu0
        %v1641 = vadd.f32 %v1628, %v1640
        %v1642 = vpop.f32.mrf.mxu0
        %1643 = vdwg.mxu0
        %s1644 = scalar_lea.vmem %s598, 256 [#allocation18]
        %v1645 = vld [vmem:[%s1644] sm:$0xff]
        %v1646 = vld [vmem:[%s1644 + $0x8] sm:$0xff]
        %v1647 = vld [vmem:[%s1644 + $0x10] sm:$0xff]
        %v1648 = vld [vmem:[%s1644 + $0x18] sm:$0xff]
        %v1649 = vld [vmem:[%s1644 + $0x20] sm:$0xff]
        %v1650 = vld [vmem:[%s1644 + $0x28] sm:$0xff]
        %v1651 = vld [vmem:[%s1644 + $0x30] sm:$0xff]
        %v1652 = vld [vmem:[%s1644 + $0x38] sm:$0xff]
        %v1653 = vld [vmem:[%s1644 + $0x40] sm:$0xff]
        %v1654 = vld [vmem:[%s1644 + $0x48] sm:$0xff]
        %v1655 = vld [vmem:[%s1644 + $0x50] sm:$0xff]
        %v1656 = vld [vmem:[%s1644 + $0x58] sm:$0xff]
        %v1657 = vld [vmem:[%s1644 + $0x60] sm:$0xff]
        %v1658 = vld [vmem:[%s1644 + $0x68] sm:$0xff]
        %v1659 = vld [vmem:[%s1644 + $0x70] sm:$0xff]
        %v1660 = vld [vmem:[%s1644 + $0x78] sm:$0xff]
        %v1661 = vld [vmem:[%s1644 + $0x80] sm:$0xff]
        %v1662 = vld [vmem:[%s1644 + $0x88] sm:$0xff]
        %v1663 = vld [vmem:[%s1644 + $0x90] sm:$0xff]
        %v1664 = vld [vmem:[%s1644 + $0x98] sm:$0xff]
        %v1665 = vld [vmem:[%s1644 + $0xa0] sm:$0xff]
        %v1666 = vld [vmem:[%s1644 + $0xa8] sm:$0xff]
        %v1667 = vld [vmem:[%s1644 + $0xb0] sm:$0xff]
        %v1668 = vld [vmem:[%s1644 + $0xb8] sm:$0xff]
        %v1669 = vld [vmem:[%s1644 + $0xc0] sm:$0xff]
        %v1670 = vld [vmem:[%s1644 + $0xc8] sm:$0xff]
        %v1671 = vld [vmem:[%s1644 + $0xd0] sm:$0xff]
        %v1672 = vld [vmem:[%s1644 + $0xd8] sm:$0xff]
        %v1673 = vld [vmem:[%s1644 + $0xe0] sm:$0xff]
        %v1674 = vld [vmem:[%s1644 + $0xe8] sm:$0xff]
        %v1675 = vld [vmem:[%s1644 + $0xf0] sm:$0xff]
        %v1676 = vld [vmem:[%s1644 + $0xf8] sm:$0xff]
        %v1709 = vunpack.c.l.b16 %v1645
        %v1710 = vunpack.c.h.b16 %v1645
        %v1711 = vunpack.c.l.b16 %v1646
        %v1712 = vunpack.c.h.b16 %v1646
        %v1713 = vunpack.c.l.b16 %v1647
        %v1714 = vunpack.c.h.b16 %v1647
        %v1715 = vunpack.c.l.b16 %v1648
        %v1716 = vunpack.c.h.b16 %v1648
        %v1717 = vunpack.c.l.b16 %v1649
        %v1718 = vunpack.c.h.b16 %v1649
        %v1719 = vunpack.c.l.b16 %v1650
        %v1720 = vunpack.c.h.b16 %v1650
        %v1721 = vunpack.c.l.b16 %v1651
        %v1722 = vunpack.c.h.b16 %v1651
        %v1723 = vunpack.c.l.b16 %v1652
        %v1724 = vunpack.c.h.b16 %v1652
        %v1725 = vunpack.c.l.b16 %v1653
        %v1726 = vunpack.c.h.b16 %v1653
        %v1727 = vunpack.c.l.b16 %v1654
        %v1728 = vunpack.c.h.b16 %v1654
        %v1729 = vunpack.c.l.b16 %v1655
        %v1730 = vunpack.c.h.b16 %v1655
        %v1731 = vunpack.c.l.b16 %v1656
        %v1732 = vunpack.c.h.b16 %v1656
        %v1733 = vunpack.c.l.b16 %v1657
        %v1734 = vunpack.c.h.b16 %v1657
        %v1735 = vunpack.c.l.b16 %v1658
        %v1736 = vunpack.c.h.b16 %v1658
        %v1737 = vunpack.c.l.b16 %v1659
        %v1738 = vunpack.c.h.b16 %v1659
        %v1739 = vunpack.c.l.b16 %v1660
        %v1740 = vunpack.c.h.b16 %v1660
        %v1741 = vunpack.c.l.b16 %v1661
        %v1742 = vunpack.c.h.b16 %v1661
        %v1743 = vunpack.c.l.b16 %v1662
        %v1744 = vunpack.c.h.b16 %v1662
        %v1745 = vunpack.c.l.b16 %v1663
        %v1746 = vunpack.c.h.b16 %v1663
        %v1747 = vunpack.c.l.b16 %v1664
        %v1748 = vunpack.c.h.b16 %v1664
        %v1749 = vunpack.c.l.b16 %v1665
        %v1750 = vunpack.c.h.b16 %v1665
        %v1751 = vunpack.c.l.b16 %v1666
        %v1752 = vunpack.c.h.b16 %v1666
        %v1753 = vunpack.c.l.b16 %v1667
        %v1754 = vunpack.c.h.b16 %v1667
        %v1755 = vunpack.c.l.b16 %v1668
        %v1756 = vunpack.c.h.b16 %v1668
        %v1757 = vunpack.c.l.b16 %v1669
        %v1758 = vunpack.c.h.b16 %v1669
        %v1759 = vunpack.c.l.b16 %v1670
        %v1760 = vunpack.c.h.b16 %v1670
        %v1761 = vunpack.c.l.b16 %v1671
        %v1762 = vunpack.c.h.b16 %v1671
        %v1763 = vunpack.c.l.b16 %v1672
        %v1764 = vunpack.c.h.b16 %v1672
        %v1765 = vunpack.c.l.b16 %v1673
        %v1766 = vunpack.c.h.b16 %v1673
        %v1767 = vunpack.c.l.b16 %v1674
        %v1768 = vunpack.c.h.b16 %v1674
        %v1769 = vunpack.c.l.b16 %v1675
        %v1770 = vunpack.c.h.b16 %v1675
        %v1771 = vunpack.c.l.b16 %v1676
        %v1772 = vunpack.c.h.b16 %v1676
        %v1773 = vpack.c.b16 %v1711, %v1709
        %v1774 = vpack.c.b16 %v1712, %v1710
        %v1775 = vpack.c.b16 %v1715, %v1713
        %v1776 = vpack.c.b16 %v1716, %v1714
        %v1777 = vpack.c.b16 %v1719, %v1717
        %v1778 = vpack.c.b16 %v1720, %v1718
        %v1779 = vpack.c.b16 %v1723, %v1721
        %v1780 = vpack.c.b16 %v1724, %v1722
        %v1781 = vpack.c.b16 %v1727, %v1725
        %v1782 = vpack.c.b16 %v1728, %v1726
        %v1783 = vpack.c.b16 %v1731, %v1729
        %v1784 = vpack.c.b16 %v1732, %v1730
        %v1785 = vpack.c.b16 %v1735, %v1733
        %v1786 = vpack.c.b16 %v1736, %v1734
        %v1787 = vpack.c.b16 %v1739, %v1737
        %v1788 = vpack.c.b16 %v1740, %v1738
        %v1789 = vpack.c.b16 %v1743, %v1741
        %v1790 = vpack.c.b16 %v1744, %v1742
        %v1791 = vpack.c.b16 %v1747, %v1745
        %v1792 = vpack.c.b16 %v1748, %v1746
        %v1793 = vpack.c.b16 %v1751, %v1749
        %v1794 = vpack.c.b16 %v1752, %v1750
        %v1795 = vpack.c.b16 %v1755, %v1753
        %v1796 = vpack.c.b16 %v1756, %v1754
        %v1797 = vpack.c.b16 %v1759, %v1757
        %v1798 = vpack.c.b16 %v1760, %v1758
        %v1799 = vpack.c.b16 %v1763, %v1761
        %v1800 = vpack.c.b16 %v1764, %v1762
        %v1801 = vpack.c.b16 %v1767, %v1765
        %v1802 = vpack.c.b16 %v1768, %v1766
        %v1803 = vpack.c.b16 %v1771, %v1769
        %v1804 = vpack.c.b16 %v1772, %v1770
        %1837 = vmatpush.bf16.msra.mxu0 %v1787
        %1838 = vmatpush.bf16.msra.mxu0 %v1785
        %1839 = vmatpush.bf16.msra.mxu0 %v1783
        %1840 = vmatpush.bf16.msra.mxu0 %v1781
        %1841 = vmatpush.bf16.msra.mxu0 %v1779
        %1842 = vmatpush.bf16.msra.mxu0 %v1777
        %1843 = vmatpush.bf16.msra.mxu0 %v1775
        %1844 = vmatpush.bf16.msra.mxu0 %v1773
        %1845 = vmatmul.bf16.gmra.mxu0 %v1428
        %v1846 = vpop.f32.mrf.mxu0
        %v1847 = vadd.f32 0.0, %v1846
        %v1848 = vpop.f32.mrf.mxu0
        %1849 = vdwg.mxu0
        %1850 = vmatpush.bf16.msra.mxu0 %v1803
        %1851 = vmatpush.bf16.msra.mxu0 %v1801
        %1852 = vmatpush.bf16.msra.mxu0 %v1799
        %1853 = vmatpush.bf16.msra.mxu0 %v1797
        %1854 = vmatpush.bf16.msra.mxu0 %v1795
        %1855 = vmatpush.bf16.msra.mxu0 %v1793
        %1856 = vmatpush.bf16.msra.mxu0 %v1791
        %1857 = vmatpush.bf16.msra.mxu0 %v1789
        %1858 = vmatmul.bf16.gmra.mxu0 %v1429
        %v1859 = vpop.f32.mrf.mxu0
        %v1860 = vadd.f32 %v1847, %v1859
        %v1861 = vpop.f32.mrf.mxu0
        %1862 = vdwg.mxu0
        %1863 = vmatpush.bf16.msra.mxu0 %v1788
        %1864 = vmatpush.bf16.msra.mxu0 %v1786
        %1865 = vmatpush.bf16.msra.mxu0 %v1784
        %1866 = vmatpush.bf16.msra.mxu0 %v1782
        %1867 = vmatpush.bf16.msra.mxu0 %v1780
        %1868 = vmatpush.bf16.msra.mxu0 %v1778
        %1869 = vmatpush.bf16.msra.mxu0 %v1776
        %1870 = vmatpush.bf16.msra.mxu0 %v1774
        %1871 = vmatmul.bf16.gmra.mxu0 %v1428
        %v1872 = vpop.f32.mrf.mxu0
        %v1873 = vadd.f32 0.0, %v1872
        %v1874 = vpop.f32.mrf.mxu0
        %1875 = vdwg.mxu0
        %1876 = vmatpush.bf16.msra.mxu0 %v1804
        %1877 = vmatpush.bf16.msra.mxu0 %v1802
        %1878 = vmatpush.bf16.msra.mxu0 %v1800
        %1879 = vmatpush.bf16.msra.mxu0 %v1798
        %1880 = vmatpush.bf16.msra.mxu0 %v1796
        %1881 = vmatpush.bf16.msra.mxu0 %v1794
        %1882 = vmatpush.bf16.msra.mxu0 %v1792
        %1883 = vmatpush.bf16.msra.mxu0 %v1790
        %1884 = vmatmul.bf16.gmra.mxu0 %v1429
        %v1885 = vpop.f32.mrf.mxu0
        %v1886 = vadd.f32 %v1873, %v1885
        %v1887 = vpop.f32.mrf.mxu0
        %1888 = vdwg.mxu0
        %v1889 = vsub.f32 0.0, %v1615
        %v1890 = vsub.f32 0.0, %v1641
        %v1891 = vmul.f32 %v1889, 1.442695
        %v1892 = vpow.pop %v1891
        %v1893 = vmul.f32 %v1890, 1.442695
        %v1894 = vpow.pop %v1893
        %v1895 = vadd.f32 %v1892, 1.0
        %v1896 = vadd.f32 %v1894, 1.0
        %v1897 = vrcp.pop %v1895
        %v1898 = vrcp.pop %v1896
        %v1899 = vmul.f32 %v1615, %v1897
        %v1900 = vmul.f32 %v1641, %v1898
        %v1901 = vmul.f32 %v1899, %v1860
        %v1902 = vmul.f32 %v1900, %v1886
        %v1903 = vld [vmem:[#allocation6] sm:$0xff]
        %v1904 = vld [vmem:[#allocation6 + $0x8] sm:$0xff]
        %v1905 = vpack.c.bf16 %v1901, %v1901
        %v1906 = vpack.c.bf16 %v1902, %v1902
        %v1907 = vld [vmem:[%s608] sm:$0xff]
        %v1908 = vld [vmem:[%s608 + $0x8] sm:$0xff]
        %v1909 = vld [vmem:[%s608 + $0x10] sm:$0xff]
        %v1910 = vld [vmem:[%s608 + $0x18] sm:$0xff]
        %v1911 = vld [vmem:[%s608 + $0x20] sm:$0xff]
        %v1912 = vld [vmem:[%s608 + $0x28] sm:$0xff]
        %v1913 = vld [vmem:[%s608 + $0x30] sm:$0xff]
        %v1914 = vld [vmem:[%s608 + $0x38] sm:$0xff]
        %v1915 = vld [vmem:[%s608 + $0x40] sm:$0xff]
        %v1916 = vld [vmem:[%s608 + $0x48] sm:$0xff]
        %v1917 = vld [vmem:[%s608 + $0x50] sm:$0xff]
        %v1918 = vld [vmem:[%s608 + $0x58] sm:$0xff]
        %v1919 = vld [vmem:[%s608 + $0x60] sm:$0xff]
        %v1920 = vld [vmem:[%s608 + $0x68] sm:$0xff]
        %v1921 = vld [vmem:[%s608 + $0x70] sm:$0xff]
        %v1922 = vld [vmem:[%s608 + $0x78] sm:$0xff]
        %v1923 = vld [vmem:[%s608 + $0x80] sm:$0xff]
        %v1924 = vld [vmem:[%s608 + $0x88] sm:$0xff]
        %v1925 = vld [vmem:[%s608 + $0x90] sm:$0xff]
        %v1926 = vld [vmem:[%s608 + $0x98] sm:$0xff]
        %v1927 = vld [vmem:[%s608 + $0xa0] sm:$0xff]
        %v1928 = vld [vmem:[%s608 + $0xa8] sm:$0xff]
        %v1929 = vld [vmem:[%s608 + $0xb0] sm:$0xff]
        %v1930 = vld [vmem:[%s608 + $0xb8] sm:$0xff]
        %v1931 = vld [vmem:[%s608 + $0xc0] sm:$0xff]
        %v1932 = vld [vmem:[%s608 + $0xc8] sm:$0xff]
        %v1933 = vld [vmem:[%s608 + $0xd0] sm:$0xff]
        %v1934 = vld [vmem:[%s608 + $0xd8] sm:$0xff]
        %v1935 = vld [vmem:[%s608 + $0xe0] sm:$0xff]
        %v1936 = vld [vmem:[%s608 + $0xe8] sm:$0xff]
        %v1937 = vld [vmem:[%s608 + $0xf0] sm:$0xff]
        %v1938 = vld [vmem:[%s608 + $0xf8] sm:$0xff]
        %v1971 = vunpack.c.l.b16 %v1907
        %v1972 = vunpack.c.h.b16 %v1907
        %v1973 = vunpack.c.l.b16 %v1908
        %v1974 = vunpack.c.h.b16 %v1908
        %v1975 = vunpack.c.l.b16 %v1909
        %v1976 = vunpack.c.h.b16 %v1909
        %v1977 = vunpack.c.l.b16 %v1910
        %v1978 = vunpack.c.h.b16 %v1910
        %v1979 = vunpack.c.l.b16 %v1911
        %v1980 = vunpack.c.h.b16 %v1911
        %v1981 = vunpack.c.l.b16 %v1912
        %v1982 = vunpack.c.h.b16 %v1912
        %v1983 = vunpack.c.l.b16 %v1913
        %v1984 = vunpack.c.h.b16 %v1913
        %v1985 = vunpack.c.l.b16 %v1914
        %v1986 = vunpack.c.h.b16 %v1914
        %v1987 = vunpack.c.l.b16 %v1915
        %v1988 = vunpack.c.h.b16 %v1915
        %v1989 = vunpack.c.l.b16 %v1916
        %v1990 = vunpack.c.h.b16 %v1916
        %v1991 = vunpack.c.l.b16 %v1917
        %v1992 = vunpack.c.h.b16 %v1917
        %v1993 = vunpack.c.l.b16 %v1918
        %v1994 = vunpack.c.h.b16 %v1918
        %v1995 = vunpack.c.l.b16 %v1919
        %v1996 = vunpack.c.h.b16 %v1919
        %v1997 = vunpack.c.l.b16 %v1920
        %v1998 = vunpack.c.h.b16 %v1920
        %v1999 = vunpack.c.l.b16 %v1921
        %v2000 = vunpack.c.h.b16 %v1921
        %v2001 = vunpack.c.l.b16 %v1922
        %v2002 = vunpack.c.h.b16 %v1922
        %v2003 = vunpack.c.l.b16 %v1923
        %v2004 = vunpack.c.h.b16 %v1923
        %v2005 = vunpack.c.l.b16 %v1924
        %v2006 = vunpack.c.h.b16 %v1924
        %v2007 = vunpack.c.l.b16 %v1925
        %v2008 = vunpack.c.h.b16 %v1925
        %v2009 = vunpack.c.l.b16 %v1926
        %v2010 = vunpack.c.h.b16 %v1926
        %v2011 = vunpack.c.l.b16 %v1927
        %v2012 = vunpack.c.h.b16 %v1927
        %v2013 = vunpack.c.l.b16 %v1928
        %v2014 = vunpack.c.h.b16 %v1928
        %v2015 = vunpack.c.l.b16 %v1929
        %v2016 = vunpack.c.h.b16 %v1929
        %v2017 = vunpack.c.l.b16 %v1930
        %v2018 = vunpack.c.h.b16 %v1930
        %v2019 = vunpack.c.l.b16 %v1931
        %v2020 = vunpack.c.h.b16 %v1931
        %v2021 = vunpack.c.l.b16 %v1932
        %v2022 = vunpack.c.h.b16 %v1932
        %v2023 = vunpack.c.l.b16 %v1933
        %v2024 = vunpack.c.h.b16 %v1933
        %v2025 = vunpack.c.l.b16 %v1934
        %v2026 = vunpack.c.h.b16 %v1934
        %v2027 = vunpack.c.l.b16 %v1935
        %v2028 = vunpack.c.h.b16 %v1935
        %v2029 = vunpack.c.l.b16 %v1936
        %v2030 = vunpack.c.h.b16 %v1936
        %v2031 = vunpack.c.l.b16 %v1937
        %v2032 = vunpack.c.h.b16 %v1937
        %v2033 = vunpack.c.l.b16 %v1938
        %v2034 = vunpack.c.h.b16 %v1938
        %v2035 = vpack.c.b16 %v1973, %v1971
        %v2036 = vpack.c.b16 %v1974, %v1972
        %v2037 = vpack.c.b16 %v1977, %v1975
        %v2038 = vpack.c.b16 %v1978, %v1976
        %v2039 = vpack.c.b16 %v1981, %v1979
        %v2040 = vpack.c.b16 %v1982, %v1980
        %v2041 = vpack.c.b16 %v1985, %v1983
        %v2042 = vpack.c.b16 %v1986, %v1984
        %v2043 = vpack.c.b16 %v1989, %v1987
        %v2044 = vpack.c.b16 %v1990, %v1988
        %v2045 = vpack.c.b16 %v1993, %v1991
        %v2046 = vpack.c.b16 %v1994, %v1992
        %v2047 = vpack.c.b16 %v1997, %v1995
        %v2048 = vpack.c.b16 %v1998, %v1996
        %v2049 = vpack.c.b16 %v2001, %v1999
        %v2050 = vpack.c.b16 %v2002, %v2000
        %v2051 = vpack.c.b16 %v2005, %v2003
        %v2052 = vpack.c.b16 %v2006, %v2004
        %v2053 = vpack.c.b16 %v2009, %v2007
        %v2054 = vpack.c.b16 %v2010, %v2008
        %v2055 = vpack.c.b16 %v2013, %v2011
        %v2056 = vpack.c.b16 %v2014, %v2012
        %v2057 = vpack.c.b16 %v2017, %v2015
        %v2058 = vpack.c.b16 %v2018, %v2016
        %v2059 = vpack.c.b16 %v2021, %v2019
        %v2060 = vpack.c.b16 %v2022, %v2020
        %v2061 = vpack.c.b16 %v2025, %v2023
        %v2062 = vpack.c.b16 %v2026, %v2024
        %v2063 = vpack.c.b16 %v2029, %v2027
        %v2064 = vpack.c.b16 %v2030, %v2028
        %v2065 = vpack.c.b16 %v2033, %v2031
        %v2066 = vpack.c.b16 %v2034, %v2032
        %2099 = vmatpush.bf16.msra.mxu0 %v2049
        %2100 = vmatpush.bf16.msra.mxu0 %v2047
        %2101 = vmatpush.bf16.msra.mxu0 %v2045
        %2102 = vmatpush.bf16.msra.mxu0 %v2043
        %2103 = vmatpush.bf16.msra.mxu0 %v2041
        %2104 = vmatpush.bf16.msra.mxu0 %v2039
        %2105 = vmatpush.bf16.msra.mxu0 %v2037
        %2106 = vmatpush.bf16.msra.mxu0 %v2035
        %2107 = vmatmul.bf16.gmra.mxu0 %v1905
        %v2108 = vpop.f32.mrf.mxu0
        %v2109 = vadd.f32 0.0, %v2108
        %v2110 = vpop.f32.mrf.mxu0
        %2111 = vdwg.mxu0
        %2112 = vmatpush.bf16.msra.mxu0 %v2065
        %2113 = vmatpush.bf16.msra.mxu0 %v2063
        %2114 = vmatpush.bf16.msra.mxu0 %v2061
        %2115 = vmatpush.bf16.msra.mxu0 %v2059
        %2116 = vmatpush.bf16.msra.mxu0 %v2057
        %2117 = vmatpush.bf16.msra.mxu0 %v2055
        %2118 = vmatpush.bf16.msra.mxu0 %v2053
        %2119 = vmatpush.bf16.msra.mxu0 %v2051
        %2120 = vmatmul.bf16.gmra.mxu0 %v1906
        %v2121 = vpop.f32.mrf.mxu0
        %v2122 = vadd.f32 %v2109, %v2121
        %v2123 = vpop.f32.mrf.mxu0
        %2124 = vdwg.mxu0
        %2125 = vmatpush.bf16.msra.mxu0 %v2050
        %2126 = vmatpush.bf16.msra.mxu0 %v2048
        %2127 = vmatpush.bf16.msra.mxu0 %v2046
        %2128 = vmatpush.bf16.msra.mxu0 %v2044
        %2129 = vmatpush.bf16.msra.mxu0 %v2042
        %2130 = vmatpush.bf16.msra.mxu0 %v2040
        %2131 = vmatpush.bf16.msra.mxu0 %v2038
        %2132 = vmatpush.bf16.msra.mxu0 %v2036
        %2133 = vmatmul.bf16.gmra.mxu0 %v1905
        %v2134 = vpop.f32.mrf.mxu0
        %v2135 = vadd.f32 0.0, %v2134
        %v2136 = vpop.f32.mrf.mxu0
        %2137 = vdwg.mxu0
        %2138 = vmatpush.bf16.msra.mxu0 %v2066
        %2139 = vmatpush.bf16.msra.mxu0 %v2064
        %2140 = vmatpush.bf16.msra.mxu0 %v2062
        %2141 = vmatpush.bf16.msra.mxu0 %v2060
        %2142 = vmatpush.bf16.msra.mxu0 %v2058
        %2143 = vmatpush.bf16.msra.mxu0 %v2056
        %2144 = vmatpush.bf16.msra.mxu0 %v2054
        %2145 = vmatpush.bf16.msra.mxu0 %v2052
        %2146 = vmatmul.bf16.gmra.mxu0 %v1906
        %v2147 = vpop.f32.mrf.mxu0
        %v2148 = vadd.f32 %v2135, %v2147
        %v2149 = vpop.f32.mrf.mxu0
        %2150 = vdwg.mxu0
        %v2151 = vadd.f32 %v1903, %v2122
        %v2152 = vadd.f32 %v1904, %v2148
        %2153 = vst [vmem:[#allocation6] sm:$0xff] %v2151
        %2154 = vst [vmem:[#allocation6 + $0x8] sm:$0xff] %v2152
        %p2155 = scmp.eq.s32.totalorder %s40, 1
        // Predicated region
        $region109: #{tpu_custom_call.1} parent=67 // pred_check
          %p2156 = pneg %p2155
        $region110: #{tpu_custom_call.1} parent=67 // pred_check_branch
          %2158 = sbr.rel (%p2156) target = $region112
        $region111: #{tpu_custom_call.1} parent=67 // pred_region
          %v2159 = vld [vmem:[#allocation6] sm:$0xff]
          %v2160 = vld [vmem:[#allocation6 + $0x8] sm:$0xff]
          %2161 = vst [vmem:[#allocation2] sm:$0xff] %v2159
          %2162 = vst [vmem:[#allocation2 + $0x8] sm:$0xff] %v2160
        $region112: #{tpu_custom_call.1} parent=67 // pred_fallthru
          _
        %p2163 = scmp.eq.s32.totalorder %s39, 1
        %p2164 = pnand %p2163, %p2155
        %p2165 = pneg %p2164
        // Predicated region
        $region113: #{tpu_custom_call.1} parent=67 // pred_check
          _
        $region114: #{tpu_custom_call.1} parent=67 // pred_check_branch
          %2167 = sbr.rel (%p2164) target = $region116
        $region115: #{tpu_custom_call.1} parent=67 // pred_region
          %v2168 = vld [vmem:[#allocation6] sm:$0xff]
          %v2169 = vld [vmem:[#allocation6 + $0x8] sm:$0xff]
          %v2170 = vld [vmem:[#allocation3] sm:$0xff]
          %v2171 = vld [vmem:[#allocation3 + $0x8] sm:$0xff]
          %v2172 = vadd.f32 %v2168, %v2170
          %v2173 = vadd.f32 %v2169, %v2171
          %v2174 = vmul.f32 %v2172, %v2172
          %v2175 = vmul.f32 %v2173, %v2173
          %v2176 = vadd.f32 %v2174, %v2175
          %2177 = vadd.xlane.f32.xlu0 %v2176
          %v2178 = vpop.xlane.xlu0 %2177
          %v2179 = vrcp.pop 256.0
          %v2180 = vmul.f32 256.0, %v2179
          %v2181 = vsub.f32 1.0, %v2180
          %v2182 = vmul.f32 %v2179, %v2181
          %v2183 = vadd.f32 %v2179, %v2182
          %vm2184 = vweird.f32 %v2179
          %v2185 = vsel %vm2184, %v2179, %v2183
          %v2186 = vmul.f32 %v2178, %v2185
          %v2187 = vadd.f32 %v2186, 1e-05
          %v2188 = vrsqrt.pop %v2187
          %v2189 = vmul.f32 %v2188, %v2187
          %v2190 = vmul.f32 %v2189, %v2188
          %v2191 = vmul.f32 0.5, %v2190
          %v2192 = vsub.f32 1.5, %v2191
          %v2193 = vmul.f32 %v2188, %v2192
          %vm2194 = vweird.f32 %v2187
          %vm2195 = vweird.f32 %v2188
          %vm2196 = vmor %vm2194, %vm2195
          %v2197 = vsel %vm2196, %v2188, %v2193
          %v2198 = vmul.f32 %v2172, %v2197
          %v2199 = vmul.f32 %v2173, %v2197
          %s2200 = scalar_lea.vmem %s682, 2
          %v2201 = vld [vmem:[%s2200] ss:$4 sm:$0x3]
          %v2203 = vperm.slane %v2201, 0
          %v2204 = vperm.slane %v2201, 1
          %v2207 = vmul.f32 %v2198, %v2203
          %v2208 = vmul.f32 %v2199, %v2204
          %2209 = vst [vmem:[#allocation21] sm:$0xff] %v2207
          %2210 = vst [vmem:[#allocation21 + $0x8] sm:$0xff] %v2208
        $region116: #{tpu_custom_call.1} parent=67 // pred_fallthru
          _
        // Predicated region
        $region117: #{tpu_custom_call.1} parent=67 // pred_check
          %p2211 = pneg %p351
        $region118: #{tpu_custom_call.1} parent=67 // pred_check_branch
          %2213 = sbr.rel (%p2211) target = $region120
        $region119: #{tpu_custom_call.1} parent=67 // pred_region
          %2215 = vsyncadd [#allocation9], 0
          %s2217 = sshll.u32 [#allocation21], 4
          %s2218 = int_to_ptr.vmem [resolvable:$true] %s2217
          %s2219 = sshll.u32 %s12, 4
          %s2220 = int_to_ptr.hbm [resolvable:$true] %s2219
          %2222 = dma.vmem_to_hbm [thread:$0]  %s2218, 256, %s2220, [#allocation9]
        $region120: #{tpu_custom_call.1} parent=67 // pred_fallthru
          _
        // Predicated region
        $region121: #{tpu_custom_call.1} parent=67 // pred_check
          %p2223 = pneg %p351
        $region122: #{tpu_custom_call.1} parent=67 // pred_check_branch
          %2225 = sbr.rel (%p2223) target = $region124
        $region123: #{tpu_custom_call.1} parent=67 // pred_region
          %2227 = dma.done [#allocation9], 256
        $region124: #{tpu_custom_call.1} parent=67 // pred_fallthru
          _
      $region68: #{tpu_custom_call.1} parent=5 // pred_fallthru
        _
      %p2228 = scmp.le.s32.totalorder 2, %s30
      // Predicated region
      $region125: #{tpu_custom_call.1} parent=5 // pred_check
        %p2229 = pneg %p2228
      $region126: #{tpu_custom_call.1} parent=5 // pred_check_branch
        %2231 = sbr.rel (%p2229) target = $region128
      $region127: #{tpu_custom_call.1} parent=5 // pred_region
        %s2232 = ssub.s32 %s30, 2
      $region128: #{tpu_custom_call.1} parent=5 // pred_fallthru
        _
    $region6: #{tpu_custom_call.1} parent=1 // loop_footer
      %s34 = sadd.s32 1, %s30
    $region7: #{tpu_custom_call.1} parent=1 // loop_footer_branch
      %29 = sbr.rel target = $region3
    $region8: #{tpu_custom_call.1} parent=1 // loop_exit
      _
    %2233 = vsyncpa [#allocation8], 1
    %s2234 = scalar_lea.sflag [#allocation8], 1
    %2235 = vsyncpa %s2234, 1
    %2236 = vsyncpa [#allocation11], 1
    %2237 = vsyncpa [#allocation14], 1
    %s2238 = scalar_lea.sflag [#allocation14], 1
    %2239 = vsyncpa %s2238, 1
    %2240 = vsyncpa [#allocation17], 1
    %s2241 = scalar_lea.sflag [#allocation17], 1
    %2242 = vsyncpa %s2241, 1
    %2243 = vsyncpa [#allocation20], 1
    %s2244 = scalar_lea.sflag [#allocation20], 1
    %2245 = vsyncpa %s2244, 1
    %2246 = vsyncpa [#allocation9], 1
    %s2247 = scalar_lea.sflag [#allocation9], 1
    %2248 = vsyncpa %s2247, 1

</llo_original>
